<compile_context>
chip_gen: v7x
topology: tpu7x:2x2x1
jax: 0.10.0
libtpu: 0.0.40
codegen_flags: <defaults>
</compile_context>

<pallas_src>
import functools

import numpy as np
import jax
import jax.numpy as jnp
from jax import lax
from jax.experimental import pallas as pl
from jax.experimental.pallas import tpu as pltpu

_BIG = 1e10                 # "infinite" distance for masking (matches CUDA huge-init)
_MM_DTYPE = jnp.bfloat16    # MXU input dtype for the MLP matmuls (f32 accumulation)


# --------------------------------------------------------------------------- #
# Kernel 1: fused three_nn + inverse-distance weights + three_interpolate + cat
# --------------------------------------------------------------------------- #
def _nn_interp_kernel(has_ufeat, u_ref, ubid_ref, kt_ref, kbid_ref, kfeat_ref, *rest):
    if has_ufeat:
        ufeat_ref, out_ref = rest
    else:
        (out_ref,) = rest

    u = u_ref[...]                      # (tn, 3)  f32
    kt = kt_ref[...]                    # (3, M)   f32
    tn = u.shape[0]
    m = kt.shape[1]

    # Pairwise squared distances on the MXU (frees the VALU slot).
    cross = jnp.dot(u, kt, preferred_element_type=jnp.float32)      # (tn, M)
    u2 = jnp.sum(u * u, axis=1, keepdims=True)                      # (tn, 1)
    k2 = jnp.sum(kt * kt, axis=0, keepdims=True)                    # (1, M)
    d2 = jnp.maximum(u2 + k2 - 2.0 * cross, 0.0)

    # Only neighbours from the same stacked batch are valid.
    same = ubid_ref[...] == kbid_ref[...]                            # (tn, M) bool
    d2 = jnp.where(same, d2, _BIG)

    m_iota = lax.broadcasted_iota(jnp.int32, (tn, m), 1)

    recips = []
    onehots = []
    for _ in range(3):
        dmin = jnp.min(d2, axis=1, keepdims=True)                    # (tn, 1)
        is_min = d2 == dmin
        # first occurrence wins on ties (matches CUDA strict-< update rule)
        first = jnp.min(jnp.where(is_min, m_iota, m), axis=1, keepdims=True)
        onehot = m_iota == first                                     # (tn, M)
        d2 = jnp.where(onehot, _BIG, d2)
        # ThreeNN returns sqrt(dist2); reciprocal on the EUP (approx) is ~free.
        recips.append(pl.reciprocal(jnp.sqrt(dmin) + 1e-8, approx=True))
        onehots.append(onehot)

    inv_norm = pl.reciprocal(recips[0] + recips[1] + recips[2], approx=True)

    wmat = jnp.zeros((tn, m), jnp.float32)
    for r, oh in zip(recips, onehots):
        wmat = wmat + (r * inv_norm) * oh.astype(jnp.float32)

    # Fused three_interpolate: (tn, M) @ (M, C2) on the MXU, never hits HBM.
    interp = jnp.dot(wmat, kfeat_ref[...], preferred_element_type=jnp.float32)

    if has_ufeat:
        out = jnp.concatenate([interp, ufeat_ref[...].astype(jnp.float32)], axis=1)
    else:
        out = interp
    out_ref[...] = out.astype(out_ref.dtype)


# --------------------------------------------------------------------------- #
# Kernel A: per-layer 1x1 conv (linear) + batch-stat accumulation over N tiles
# --------------------------------------------------------------------------- #
def _linear_stats_kernel(n_valid, tile_n, x_ref, w_ref, y_ref, stats_ref):
    i = pl.program_id(0)

    @pl.when(i == 0)
    def _():
        stats_ref[...] = jnp.zeros_like(stats_ref)

    y = jnp.dot(x_ref[...].astype(_MM_DTYPE), w_ref[...],
                preferred_element_type=jnp.float32)                  # (tn, C_out) f32
    y_ref[...] = y

    # Mask padding rows out of the batch statistics (they never reach the output).
    row = i * tile_n + lax.broadcasted_iota(jnp.int32, (tile_n, 1), 0)
    ym = jnp.where(row < n_valid, y, 0.0)
    s1 = jnp.sum(ym, axis=0, keepdims=True)
    s2 = jnp.sum(ym * ym, axis=0, keepdims=True)
    stats_ref[...] = stats_ref[...] + jnp.concatenate([s1, s2], axis=0)


# --------------------------------------------------------------------------- #
# Kernel B: per-layer BatchNorm (training-mode batch stats) + ReLU, N-tiled
# --------------------------------------------------------------------------- #
def _bn_relu_kernel(inv_n, eps, y_ref, stats_ref, g_ref, b_ref, out_ref):
    stats = stats_ref[...]                                           # (2, C_out)
    mean = stats[0:1, :] * inv_n
    ex2 = stats[1:2, :] * inv_n
    var = jnp.maximum(ex2 - mean * mean, 0.0)                        # biased variance
    inv_std = lax.rsqrt(var + eps)
    scale = g_ref[...] * inv_std                                     # (1, C_out)
    shift = b_ref[...] - mean * scale                                # (1, C_out)
    out_ref[...] = jnp.maximum(y_ref[...] * scale + shift, 0.0).astype(out_ref.dtype)


# --------------------------------------------------------------------------- #
# Host-side glue
# --------------------------------------------------------------------------- #
def _pick_tile_n(tile_n, m, budget_bytes=24 << 20):
    """Shrink tile_n so the (tile_n, M) f32 working set stays well inside VMEM
    (conservative enough for v7x's 64 MiB per TensorCore)."""
    m_pad = max(m, 128)
    while tile_n > 8 and 8 * tile_n * m_pad * 4 > budget_bytes:
        tile_n //= 2
    return max(tile_n, 8)


def _pad_rows(x, n_pad):
    n = x.shape[0]
    if n == n_pad:
        return x
    pad = jnp.zeros((n_pad - n,) + x.shape[1:], x.dtype)
    return jnp.concatenate([x, pad], axis=0)


def stack_pointnet_fp_forward(unknown, unknown_batch_cnt, known, known_batch_cnt,
                              unknown_feats, known_feats, mlp_params,
                              eps=1e-5, tile_n=128):
    """JAX/Pallas equivalent of StackPointnetFPModule.forward.

    mlp_params: list of (w (C_in, C_out), gamma (1, C_out), beta (1, C_out)).
    Returns (N, C_out) float32.
    """
    N = unknown.shape[0]
    M = known.shape[0]
    B = len(unknown_batch_cnt)
    has_ufeat = unknown_feats is not None

    tile_n = _pick_tile_n(tile_n, M)
    n_tiles = pl.cdiv(N, tile_n)
    N_pad = n_tiles * tile_n

    # Per-point batch ids from the (host-static) stacked batch counts.
    unk_bid_np = np.full((N_pad,), -1, np.int32)
    unk_bid_np[:N] = np.repeat(np.arange(B, dtype=np.int32),
                               np.asarray(unknown_batch_cnt))
    kn_bid_np = np.repeat(np.arange(B, dtype=np.int32),
                          np.asarray(known_batch_cnt)).reshape(1, M)
    unk_bid = jnp.asarray(unk_bid_np.reshape(N_pad, 1))
    kn_bid = jnp.asarray(kn_bid_np)

    unknown_p = _pad_rows(unknown.astype(jnp.float32), N_pad)         # (N_pad, 3)
    known_t = known.astype(jnp.float32).T                             # (3, M)
    kfeat = known_feats.astype(jnp.float32)                           # (M, C2)
    c2 = kfeat.shape[1]

    if has_ufeat:
        ufeat_p = _pad_rows(unknown_feats.astype(jnp.float32), N_pad)
        c1 = ufeat_p.shape[1]
    else:
        ufeat_p = None
        c1 = 0
    c_in0 = c1 + c2
    assert mlp_params[0][0].shape[0] == c_in0, "first MLP width must equal C2 + C1"

    # ---- Kernel 1: fused 3-NN + inverse-distance interpolation + concat ----
    in_specs = [
        pl.BlockSpec((tile_n, 3), lambda i: (i, 0)),    # unknown coords (tiled)
        pl.BlockSpec((tile_n, 1), lambda i: (i, 0)),    # unknown batch ids (tiled)
        pl.BlockSpec((3, M), lambda i: (0, 0)),         # known coords^T (resident)
        pl.BlockSpec((1, M), lambda i: (0, 0)),         # known batch ids (resident)
        pl.BlockSpec((M, c2), lambda i: (0, 0)),        # known feats (resident)
    ]
    args = [unknown_p, unk_bid, known_t, kn_bid, kfeat]
    if has_ufeat:
        in_specs.append(pl.BlockSpec((tile_n, c1), lambda i: (i, 0)))
        args.append(ufeat_p)

    x = pl.pallas_call(
        functools.partial(_nn_interp_kernel, has_ufeat),
        out_shape=jax.ShapeDtypeStruct((N_pad, c_in0), jnp.float32),
        grid=(n_tiles,),
        in_specs=in_specs,
        out_specs=pl.BlockSpec((tile_n, c_in0), lambda i: (i, 0)),
        compiler_params=pltpu.CompilerParams(dimension_semantics=("parallel",)),
    )(*args)

    # ---- Shared MLP: per layer, (linear + stats) then (BN + ReLU), N-tiled ----
    for (w, g, b) in mlp_params:
        c_in, c_out = w.shape
        w_mm = w.astype(_MM_DTYPE)

        y, stats = pl.pallas_call(
            functools.partial(_linear_stats_kernel, N, tile_n),
            out_shape=(jax.ShapeDtypeStruct((N_pad, c_out), jnp.float32),
                       jax.ShapeDtypeStruct((2, c_out), jnp.float32)),
            grid=(n_tiles,),
            in_specs=[pl.BlockSpec((tile_n, c_in), lambda i: (i, 0)),
                      pl.BlockSpec((c_in, c_out), lambda i: (0, 0))],
            out_specs=(pl.BlockSpec((tile_n, c_out), lambda i: (i, 0)),
                       pl.BlockSpec((2, c_out), lambda i: (0, 0))),
            compiler_params=pltpu.CompilerParams(
                dimension_semantics=("arbitrary",)),   # stats accumulate across N
        )(x, w_mm)

        x = pl.pallas_call(
            functools.partial(_bn_relu_kernel, 1.0 / float(N), eps),
            out_shape=jax.ShapeDtypeStruct((N_pad, c_out), jnp.float32),
            grid=(n_tiles,),
            in_specs=[pl.BlockSpec((tile_n, c_out), lambda i: (i, 0)),
                      pl.BlockSpec((2, c_out), lambda i: (0, 0)),
                      pl.BlockSpec((1, c_out), lambda i: (0, 0)),
                      pl.BlockSpec((1, c_out), lambda i: (0, 0))],
            out_specs=pl.BlockSpec((tile_n, c_out), lambda i: (i, 0)),
            compiler_params=pltpu.CompilerParams(
                dimension_semantics=("parallel",)),
        )(y, stats, g, b)

    return x[:N]


def make_mlp_params(key, mlp):
    """Deterministic synthetic params for [Conv2d(1x1, bias=False), BN2d, ReLU]*L."""
    params = []
    for k in range(len(mlp) - 1):
        c_in, c_out = mlp[k], mlp[k + 1]
        key, kw, kg, kb = jax.random.split(key, 4)
        w = jax.random.normal(kw, (c_in, c_out), jnp.float32) * 0.1   # conv weight^T
        gamma = 1.0 + 0.1 * jax.random.normal(kg, (1, c_out), jnp.float32)
        beta = 0.05 * jax.random.normal(kb, (1, c_out), jnp.float32)
        params.append((w, gamma, beta))
    return params


if __name__ == "__main__":
    key = jax.random.PRNGKey(0)
    k1, k2, k3, k4, k5 = jax.random.split(key, 5)

    # Stacked-batch shapes: B=2, N = 160+96 = 256 unknown pts, M = 40+24 = 64 known pts.
    # tile_n=128 -> grid=(2,), so the tiling / BN grid-reduction paths are exercised.
    unknown_batch_cnt = [160, 96]
    known_batch_cnt = [40, 24]
    N = sum(unknown_batch_cnt)
    M = sum(known_batch_cnt)
    C1 = 8    # unknown_feats channels
    C2 = 8    # known_feats channels
    mlp = [C2 + C1, 32, 16]   # first width must equal C2 + C1 (post-concat channels)

    unknown = jax.random.normal(k1, (N, 3), jnp.float32)
    known = jax.random.normal(k2, (M, 3), jnp.float32)
    unknown_feats = jax.random.normal(k3, (N, C1), jnp.float32)
    known_feats = jax.random.normal(k4, (M, C2), jnp.float32)
    mlp_params = make_mlp_params(k5, mlp)

    out = stack_pointnet_fp_forward(unknown, unknown_batch_cnt, known, known_batch_cnt,
                                    unknown_feats, known_feats, mlp_params)
    out = jax.block_until_ready(out)
    assert out.shape == (N, mlp[-1]) and out.dtype == jnp.float32
    assert bool(jnp.all(jnp.isfinite(out)))
    print("KERNEL_OK")
</pallas_src>

<mosaic_0001>
module attributes {stable_mosaic.version = 11 : i64} {
  func.func @_nn_interp_kernel(%arg0: i32, %arg1: memref<128x3xf32, #tpu.memory_space<vmem>>, %arg2: memref<128x1xi32, #tpu.memory_space<vmem>>, %arg3: memref<3x64xf32, #tpu.memory_space<vmem>>, %arg4: memref<1x64xi32, #tpu.memory_space<vmem>>, %arg5: memref<64x8xf32, #tpu.memory_space<vmem>>, %arg6: memref<128x8xf32, #tpu.memory_space<vmem>>, %arg7: memref<128x16xf32, #tpu.memory_space<vmem>>) attributes {dimension_semantics = [#tpu.dimension_semantics<parallel>], iteration_bounds = array<i64: 2>, scalar_prefetch = 0 : i64, scratch_operands = 0 : i64, tpu.core_type = #tpu.core_type<tc>, window_params = [{transform_indices = @transform_0, window_bounds = array<i64: 128, 3>}, {transform_indices = @transform_1, window_bounds = array<i64: 128, 1>}, {pipeline_mode = #tpu.pipeline_mode<synchronous>, transform_indices = @transform_2, window_bounds = array<i64: 3, 64>}, {pipeline_mode = #tpu.pipeline_mode<synchronous>, transform_indices = @transform_3, window_bounds = array<i64: 1, 64>}, {pipeline_mode = #tpu.pipeline_mode<synchronous>, transform_indices = @transform_4, window_bounds = array<i64: 64, 8>}, {transform_indices = @transform_5, window_bounds = array<i64: 128, 8>}, {transform_indices = @transform_6, window_bounds = array<i64: 128, 16>}]} {
    %c0 = arith.constant 0 : index
    %c0_0 = arith.constant 0 : index
    %0 = vector.load %arg1[%c0, %c0_0] : memref<128x3xf32, #tpu.memory_space<vmem>>, vector<128x3xf32>
    %c0_1 = arith.constant 0 : index
    %c0_2 = arith.constant 0 : index
    %1 = vector.load %arg3[%c0_1, %c0_2] : memref<3x64xf32, #tpu.memory_space<vmem>>, vector<3x64xf32>
    %cst = arith.constant dense<0.000000e+00> : vector<128x64xf32>
    %2 = tpu.matmul %0, %1, %cst {dimension_numbers = #tpu.dot_dimension_numbers<[1], [0], [0], [1], [0, 0, 1, 1], [], []>} : vector<128x3xf32>, vector<3x64xf32>, vector<128x64xf32> -> vector<128x64xf32>
    %3 = arith.mulf %0, %0 : vector<128x3xf32>
    %cst_3 = arith.constant dense<0.000000e+00> : vector<128xf32>
    %4 = vector.multi_reduction <add>, %3, %cst_3 [1] : vector<128x3xf32> to vector<128xf32>
    %5 = vector.shape_cast %4 : vector<128xf32> to vector<128x1xf32>
    %6 = arith.mulf %1, %1 : vector<3x64xf32>
    %cst_4 = arith.constant dense<0.000000e+00> : vector<64xf32>
    %7 = vector.multi_reduction <add>, %6, %cst_4 [0] : vector<3x64xf32> to vector<64xf32>
    %8 = vector.shape_cast %7 : vector<64xf32> to vector<1x64xf32>
    %9 = vector.broadcast %5 : vector<128x1xf32> to vector<128x64xf32>
    %10 = vector.broadcast %8 : vector<1x64xf32> to vector<128x64xf32>
    %11 = arith.addf %9, %10 : vector<128x64xf32>
    %cst_5 = arith.constant 2.000000e+00 : f32
    %12 = vector.broadcast %cst_5 : f32 to vector<128x64xf32>
    %13 = arith.mulf %12, %2 : vector<128x64xf32>
    %14 = arith.subf %11, %13 : vector<128x64xf32>
    %cst_6 = arith.constant 0.000000e+00 : f32
    %15 = vector.broadcast %cst_6 : f32 to vector<128x64xf32>
    %16 = arith.maximumf %14, %15 : vector<128x64xf32>
    %c0_7 = arith.constant 0 : index
    %c0_8 = arith.constant 0 : index
    %17 = vector.load %arg2[%c0_7, %c0_8] : memref<128x1xi32, #tpu.memory_space<vmem>>, vector<128x1xi32>
    %c0_9 = arith.constant 0 : index
    %c0_10 = arith.constant 0 : index
    %18 = vector.load %arg4[%c0_9, %c0_10] : memref<1x64xi32, #tpu.memory_space<vmem>>, vector<1x64xi32>
    %19 = vector.broadcast %17 : vector<128x1xi32> to vector<128x64xi32>
    %20 = vector.broadcast %18 : vector<1x64xi32> to vector<128x64xi32>
    %21 = arith.cmpi eq, %19, %20 : vector<128x64xi32>
    %cst_11 = arith.constant 1.000000e+10 : f32
    %22 = vector.broadcast %cst_11 : f32 to vector<128x64xf32>
    %23 = arith.select %21, %16, %22 : vector<128x64xi1>, vector<128x64xf32>
    %24 = tpu.iota {dimensions = array<i32: 1>} : vector<128x64xi32>
    %cst_12 = arith.constant dense<0x7F800000> : vector<128xf32>
    %25 = vector.multi_reduction <minimumf>, %23, %cst_12 [1] : vector<128x64xf32> to vector<128xf32>
    %26 = vector.shape_cast %25 : vector<128xf32> to vector<128x1xf32>
    %27 = vector.broadcast %26 : vector<128x1xf32> to vector<128x64xf32>
    %28 = arith.cmpf oeq, %23, %27 : vector<128x64xf32>
    %c64_i32 = arith.constant 64 : i32
    %29 = vector.broadcast %c64_i32 : i32 to vector<128x64xi32>
    %30 = arith.select %28, %24, %29 : vector<128x64xi1>, vector<128x64xi32>
    %cst_13 = arith.constant dense<2147483647> : vector<128xi32>
    %31 = vector.multi_reduction <minsi>, %30, %cst_13 [1] : vector<128x64xi32> to vector<128xi32>
    %32 = vector.shape_cast %31 : vector<128xi32> to vector<128x1xi32>
    %33 = vector.broadcast %32 : vector<128x1xi32> to vector<128x64xi32>
    %34 = arith.cmpi eq, %24, %33 : vector<128x64xi32>
    %cst_14 = arith.constant 1.000000e+10 : f32
    %35 = vector.broadcast %cst_14 : f32 to vector<128x64xf32>
    %36 = arith.select %34, %35, %23 : vector<128x64xi1>, vector<128x64xf32>
    %37 = math.sqrt %26 : vector<128x1xf32>
    %cst_15 = arith.constant 9.99999993E-9 : f32
    %38 = vector.broadcast %cst_15 : f32 to vector<128x1xf32>
    %39 = arith.addf %37, %38 : vector<128x1xf32>
    %40 = tpu.reciprocal %39 {approx = true} : vector<128x1xf32> -> vector<128x1xf32>
    %cst_16 = arith.constant dense<0x7F800000> : vector<128xf32>
    %41 = vector.multi_reduction <minimumf>, %36, %cst_16 [1] : vector<128x64xf32> to vector<128xf32>
    %42 = vector.shape_cast %41 : vector<128xf32> to vector<128x1xf32>
    %43 = vector.broadcast %42 : vector<128x1xf32> to vector<128x64xf32>
    %44 = arith.cmpf oeq, %36, %43 : vector<128x64xf32>
    %c64_i32_17 = arith.constant 64 : i32
    %45 = vector.broadcast %c64_i32_17 : i32 to vector<128x64xi32>
    %46 = arith.select %44, %24, %45 : vector<128x64xi1>, vector<128x64xi32>
    %cst_18 = arith.constant dense<2147483647> : vector<128xi32>
    %47 = vector.multi_reduction <minsi>, %46, %cst_18 [1] : vector<128x64xi32> to vector<128xi32>
    %48 = vector.shape_cast %47 : vector<128xi32> to vector<128x1xi32>
    %49 = vector.broadcast %48 : vector<128x1xi32> to vector<128x64xi32>
    %50 = arith.cmpi eq, %24, %49 : vector<128x64xi32>
    %cst_19 = arith.constant 1.000000e+10 : f32
    %51 = vector.broadcast %cst_19 : f32 to vector<128x64xf32>
    %52 = arith.select %50, %51, %36 : vector<128x64xi1>, vector<128x64xf32>
    %53 = math.sqrt %42 : vector<128x1xf32>
    %cst_20 = arith.constant 9.99999993E-9 : f32
    %54 = vector.broadcast %cst_20 : f32 to vector<128x1xf32>
    %55 = arith.addf %53, %54 : vector<128x1xf32>
    %56 = tpu.reciprocal %55 {approx = true} : vector<128x1xf32> -> vector<128x1xf32>
    %cst_21 = arith.constant dense<0x7F800000> : vector<128xf32>
    %57 = vector.multi_reduction <minimumf>, %52, %cst_21 [1] : vector<128x64xf32> to vector<128xf32>
    %58 = vector.shape_cast %57 : vector<128xf32> to vector<128x1xf32>
    %59 = vector.broadcast %58 : vector<128x1xf32> to vector<128x64xf32>
    %60 = arith.cmpf oeq, %52, %59 : vector<128x64xf32>
    %c64_i32_22 = arith.constant 64 : i32
    %61 = vector.broadcast %c64_i32_22 : i32 to vector<128x64xi32>
    %62 = arith.select %60, %24, %61 : vector<128x64xi1>, vector<128x64xi32>
    %cst_23 = arith.constant dense<2147483647> : vector<128xi32>
    %63 = vector.multi_reduction <minsi>, %62, %cst_23 [1] : vector<128x64xi32> to vector<128xi32>
    %64 = vector.shape_cast %63 : vector<128xi32> to vector<128x1xi32>
    %65 = vector.broadcast %64 : vector<128x1xi32> to vector<128x64xi32>
    %66 = arith.cmpi eq, %24, %65 : vector<128x64xi32>
    %67 = math.sqrt %58 : vector<128x1xf32>
    %cst_24 = arith.constant 9.99999993E-9 : f32
    %68 = vector.broadcast %cst_24 : f32 to vector<128x1xf32>
    %69 = arith.addf %67, %68 : vector<128x1xf32>
    %70 = tpu.reciprocal %69 {approx = true} : vector<128x1xf32> -> vector<128x1xf32>
    %71 = arith.addf %40, %56 : vector<128x1xf32>
    %72 = arith.addf %71, %70 : vector<128x1xf32>
    %73 = tpu.reciprocal %72 {approx = true} : vector<128x1xf32> -> vector<128x1xf32>
    %cst_25 = arith.constant 0.000000e+00 : f32
    %74 = vector.broadcast %cst_25 : f32 to vector<128x64xf32>
    %75 = arith.mulf %40, %73 : vector<128x1xf32>
    %76 = arith.extui %34 : vector<128x64xi1> to vector<128x64xi32>
    %77 = arith.sitofp %76 : vector<128x64xi32> to vector<128x64xf32>
    %78 = vector.broadcast %75 : vector<128x1xf32> to vector<128x64xf32>
    %79 = arith.mulf %78, %77 : vector<128x64xf32>
    %80 = arith.addf %74, %79 : vector<128x64xf32>
    %81 = arith.mulf %56, %73 : vector<128x1xf32>
    %82 = arith.extui %50 : vector<128x64xi1> to vector<128x64xi32>
    %83 = arith.sitofp %82 : vector<128x64xi32> to vector<128x64xf32>
    %84 = vector.broadcast %81 : vector<128x1xf32> to vector<128x64xf32>
    %85 = arith.mulf %84, %83 : vector<128x64xf32>
    %86 = arith.addf %80, %85 : vector<128x64xf32>
    %87 = arith.mulf %70, %73 : vector<128x1xf32>
    %88 = arith.extui %66 : vector<128x64xi1> to vector<128x64xi32>
    %89 = arith.sitofp %88 : vector<128x64xi32> to vector<128x64xf32>
    %90 = vector.broadcast %87 : vector<128x1xf32> to vector<128x64xf32>
    %91 = arith.mulf %90, %89 : vector<128x64xf32>
    %92 = arith.addf %86, %91 : vector<128x64xf32>
    %c0_26 = arith.constant 0 : index
    %c0_27 = arith.constant 0 : index
    %93 = vector.load %arg5[%c0_26, %c0_27] : memref<64x8xf32, #tpu.memory_space<vmem>>, vector<64x8xf32>
    %cst_28 = arith.constant dense<0.000000e+00> : vector<128x8xf32>
    %94 = tpu.matmul %92, %93, %cst_28 {dimension_numbers = #tpu.dot_dimension_numbers<[1], [0], [0], [1], [0, 0, 1, 1], [], []>} : vector<128x64xf32>, vector<64x8xf32>, vector<128x8xf32> -> vector<128x8xf32>
    %c0_29 = arith.constant 0 : index
    %c0_30 = arith.constant 0 : index
    %95 = vector.load %arg6[%c0_29, %c0_30] : memref<128x8xf32, #tpu.memory_space<vmem>>, vector<128x8xf32>
    %96 = tpu.concatenate %94, %95 in 1 : vector<128x8xf32>, vector<128x8xf32> -> vector<128x16xf32>
    %c0_31 = arith.constant 0 : index
    %c0_32 = arith.constant 0 : index
    %97 = vector.load %arg7[%c0_31, %c0_32] : memref<128x16xf32, #tpu.memory_space<vmem>>, vector<128x16xf32>
    tpu.vector_store %arg7[%c0_31, %c0_32], %96 {strides = array<i32>} : memref<128x16xf32, #tpu.memory_space<vmem>>, vector<128x16xf32>,
    return
  }
  func.func @transform_0(%arg0: i32) -> (i32, i32) {
    %c0_i32 = arith.constant 0 : i32
    %c0_i32_0 = arith.constant 0 : i32
    return %arg0, %c0_i32 : i32, i32
  }
  func.func @transform_1(%arg0: i32) -> (i32, i32) {
    %c0_i32 = arith.constant 0 : i32
    %c0_i32_0 = arith.constant 0 : i32
    return %arg0, %c0_i32 : i32, i32
  }
  func.func @transform_2(%arg0: i32) -> (i32, i32) {
    %c0_i32 = arith.constant 0 : i32
    %c0_i32_0 = arith.constant 0 : i32
    %c0_i32_1 = arith.constant 0 : i32
    return %c0_i32, %c0_i32_0 : i32, i32
  }
  func.func @transform_3(%arg0: i32) -> (i32, i32) {
    %c0_i32 = arith.constant 0 : i32
    %c0_i32_0 = arith.constant 0 : i32
    %c0_i32_1 = arith.constant 0 : i32
    return %c0_i32, %c0_i32_0 : i32, i32
  }
  func.func @transform_4(%arg0: i32) -> (i32, i32) {
    %c0_i32 = arith.constant 0 : i32
    %c0_i32_0 = arith.constant 0 : i32
    %c0_i32_1 = arith.constant 0 : i32
    return %c0_i32, %c0_i32_0 : i32, i32
  }
  func.func @transform_5(%arg0: i32) -> (i32, i32) {
    %c0_i32 = arith.constant 0 : i32
    %c0_i32_0 = arith.constant 0 : i32
    return %arg0, %c0_i32 : i32, i32
  }
  func.func @transform_6(%arg0: i32) -> (i32, i32) {
    %c0_i32 = arith.constant 0 : i32
    %c0_i32_0 = arith.constant 0 : i32
    return %arg0, %c0_i32 : i32, i32
  }
}

</mosaic_0001>

<llo_original>
// kernel: tpu_custom_call.1
$region0: #{tpu_custom_call.1}
  #allocation0 [shape = 'u32[]', space=smem, size = 0x4, offset = 0x4, fixed_abs, tag = 'smem constant byte address 0x4 - core index']
  #allocation1 [shape = 'u32[144,128]{1,0:T(1,128)}', space=vmem, size = 0x12000, scoped, tag = 'internal scratch']
  %s0 = inlined_call_operand.vmem [shape: f32[256,3], index: 0, kind: input, shape index: {}]
  %s1 = inlined_call_operand.vmem [shape: s32[256,1], index: 1, kind: input, shape index: {}]
  %s2 = inlined_call_operand.vmem [shape: f32[3,64], index: 2, kind: input, shape index: {}]
  %s3 = inlined_call_operand.vmem [shape: s32[1,64], index: 3, kind: input, shape index: {}]
  %s4 = inlined_call_operand.vmem [shape: f32[64,8], index: 4, kind: input, shape index: {}]
  %s5 = inlined_call_operand.vmem [shape: f32[256,8], index: 5, kind: input, shape index: {}]
  %s6 = inlined_call_operand.vmem [shape: f32[256,16], index: 6, kind: output, shape index: {}]
  %s7 = sld [smem:[#allocation0]]
  $region57: #{tpu_custom_call.1} parent=0
    _
  %s9 = ssub.s32 1, %s7
  %s10 = scalar_select 0, %s9, %s7
  loop: start=0, step=1, limit=4
  $region2: #{tpu_custom_call.1} parent=0 // loop_pre_header
    _
  $region3: #{tpu_custom_call.1} parent=0 // loop_header
    %s12 = sphi 0, %s16
    %p13 = scmp.ge.s32.totalorder %s12, 4
    %s22 = sphi 0, %s24
    %s25 = sphi 0, %s22
    %s26 = sphi 0, %s25
    %s42 = sphi 0, %s26
    %s48 = sphi 0, %s50
    %s51 = sphi 0, %s48
    %s52 = sphi 0, %s51
    %s68 = sphi 0, %s52
    %s72 = sphi 0, %s72
    %s74 = sphi 0, %s72
    %s75 = sphi 0, %s74
    %s89 = sphi 0, %s75
    %s93 = sphi 0, %s93
    %s95 = sphi 0, %s93
    %s96 = sphi 0, %s95
    %s110 = sphi 0, %s96
    %s114 = sphi 0, %s114
    %s116 = sphi 0, %s114
    %s117 = sphi 0, %s116
    %s131 = sphi 0, %s117
    %s137 = sphi 0, %s139
    %s140 = sphi 0, %s137
    %s141 = sphi 0, %s140
    %s157 = sphi 0, %s141
    %s163 = sphi 0, %s165
    %s166 = sphi 0, %s163
    %s167 = sphi 0, %s166
    %s183 = sphi 0, %s167
  $region4: #{tpu_custom_call.1} parent=0 // loop_header_branch
    %15 = sbr.rel (%p13) target = $region8
  $region5: #{tpu_custom_call.1} parent=0 // loop_body
    %s17 = ssub.s32 %s12, 1
    %s18 = ssub.s32 %s12, 2
    %s19 = sadd.s32 %s12, 1
    %s20 = ssub.s32 %s12, %s19
    %p21 = scmp.eq.s32.totalorder %s20, 0
    %s23 = sadd.s32 %s22, 1
    %s24 = scalar_select %p21, %s22, %s23
    %p27 = pneg %p21
    %p28 = scmp.eq.s32.totalorder %s12, 1
    %p29 = por %p27, %p28
    %p30 = scmp.ne.s32.totalorder %s22, %s25
    %p31 = scmp.eq.s32.totalorder %s12, 0
    %p32 = por %p30, %p31
    %p33 = scmp.ne.s32.totalorder %s22, %s25
    %p34 = scmp.eq.s32.totalorder %s17, 1
    %p35 = por %p33, %p34
    %p36 = scmp.ne.s32.totalorder %s25, %s26
    %p37 = scmp.eq.s32.totalorder %s17, 0
    %p38 = por %p36, %p37
    %p39 = scmp.ne.s32.totalorder %s25, %s26
    %p40 = scmp.eq.s32.totalorder %s18, 1
    %p41 = por %p39, %p40
    %p43 = scmp.ne.s32.totalorder %s26, %s42
    %p44 = scmp.eq.s32.totalorder %s18, 0
    %p45 = por %p43, %p44
    %s46 = ssub.s32 %s12, %s19
    %p47 = scmp.eq.s32.totalorder %s46, 0
    %s49 = sadd.s32 %s48, 1
    %s50 = scalar_select %p47, %s48, %s49
    %p53 = pneg %p47
    %p54 = scmp.eq.s32.totalorder %s12, 1
    %p55 = por %p53, %p54
    %p56 = scmp.ne.s32.totalorder %s48, %s51
    %p57 = scmp.eq.s32.totalorder %s12, 0
    %p58 = por %p56, %p57
    %p59 = scmp.ne.s32.totalorder %s48, %s51
    %p60 = scmp.eq.s32.totalorder %s17, 1
    %p61 = por %p59, %p60
    %p62 = scmp.ne.s32.totalorder %s51, %s52
    %p63 = scmp.eq.s32.totalorder %s17, 0
    %p64 = por %p62, %p63
    %p65 = scmp.ne.s32.totalorder %s51, %s52
    %p66 = scmp.eq.s32.totalorder %s18, 1
    %p67 = por %p65, %p66
    %p69 = scmp.ne.s32.totalorder %s52, %s68
    %p70 = scmp.eq.s32.totalorder %s18, 0
    %p71 = por %p69, %p70
    %s73 = sadd.s32 %s72, 1
    %p76 = scmp.eq.s32.totalorder %s12, 1
    %p77 = scmp.ne.s32.totalorder %s72, %s74
    %p78 = scmp.eq.s32.totalorder %s12, 0
    %p79 = por %p77, %p78
    %p80 = scmp.ne.s32.totalorder %s72, %s74
    %p81 = scmp.eq.s32.totalorder %s17, 1
    %p82 = por %p80, %p81
    %p83 = scmp.ne.s32.totalorder %s74, %s75
    %p84 = scmp.eq.s32.totalorder %s17, 0
    %p85 = por %p83, %p84
    %p86 = scmp.ne.s32.totalorder %s74, %s75
    %p87 = scmp.eq.s32.totalorder %s18, 1
    %p88 = por %p86, %p87
    %p90 = scmp.ne.s32.totalorder %s75, %s89
    %p91 = scmp.eq.s32.totalorder %s18, 0
    %p92 = por %p90, %p91
    %s94 = sadd.s32 %s93, 1
    %p97 = scmp.eq.s32.totalorder %s12, 1
    %p98 = scmp.ne.s32.totalorder %s93, %s95
    %p99 = scmp.eq.s32.totalorder %s12, 0
    %p100 = por %p98, %p99
    %p101 = scmp.ne.s32.totalorder %s93, %s95
    %p102 = scmp.eq.s32.totalorder %s17, 1
    %p103 = por %p101, %p102
    %p104 = scmp.ne.s32.totalorder %s95, %s96
    %p105 = scmp.eq.s32.totalorder %s17, 0
    %p106 = por %p104, %p105
    %p107 = scmp.ne.s32.totalorder %s95, %s96
    %p108 = scmp.eq.s32.totalorder %s18, 1
    %p109 = por %p107, %p108
    %p111 = scmp.ne.s32.totalorder %s96, %s110
    %p112 = scmp.eq.s32.totalorder %s18, 0
    %p113 = por %p111, %p112
    %s115 = sadd.s32 %s114, 1
    %p118 = scmp.eq.s32.totalorder %s12, 1
    %p119 = scmp.ne.s32.totalorder %s114, %s116
    %p120 = scmp.eq.s32.totalorder %s12, 0
    %p121 = por %p119, %p120
    %p122 = scmp.ne.s32.totalorder %s114, %s116
    %p123 = scmp.eq.s32.totalorder %s17, 1
    %p124 = por %p122, %p123
    %p125 = scmp.ne.s32.totalorder %s116, %s117
    %p126 = scmp.eq.s32.totalorder %s17, 0
    %p127 = por %p125, %p126
    %p128 = scmp.ne.s32.totalorder %s116, %s117
    %p129 = scmp.eq.s32.totalorder %s18, 1
    %p130 = por %p128, %p129
    %p132 = scmp.ne.s32.totalorder %s117, %s131
    %p133 = scmp.eq.s32.totalorder %s18, 0
    %p134 = por %p132, %p133
    %s135 = ssub.s32 %s12, %s19
    %p136 = scmp.eq.s32.totalorder %s135, 0
    %s138 = sadd.s32 %s137, 1
    %s139 = scalar_select %p136, %s137, %s138
    %p142 = pneg %p136
    %p143 = scmp.eq.s32.totalorder %s12, 1
    %p144 = por %p142, %p143
    %p145 = scmp.ne.s32.totalorder %s137, %s140
    %p146 = scmp.eq.s32.totalorder %s12, 0
    %p147 = por %p145, %p146
    %p148 = scmp.ne.s32.totalorder %s137, %s140
    %p149 = scmp.eq.s32.totalorder %s17, 1
    %p150 = por %p148, %p149
    %p151 = scmp.ne.s32.totalorder %s140, %s141
    %p152 = scmp.eq.s32.totalorder %s17, 0
    %p153 = por %p151, %p152
    %p154 = scmp.ne.s32.totalorder %s140, %s141
    %p155 = scmp.eq.s32.totalorder %s18, 1
    %p156 = por %p154, %p155
    %p158 = scmp.ne.s32.totalorder %s141, %s157
    %p159 = scmp.eq.s32.totalorder %s18, 0
    %p160 = por %p158, %p159
    %s161 = ssub.s32 %s12, %s19
    %p162 = scmp.eq.s32.totalorder %s161, 0
    %s164 = sadd.s32 %s163, 1
    %s165 = scalar_select %p162, %s163, %s164
    %p168 = pneg %p162
    %p169 = scmp.eq.s32.totalorder %s12, 1
    %p170 = por %p168, %p169
    %p171 = scmp.ne.s32.totalorder %s163, %s166
    %p172 = scmp.eq.s32.totalorder %s12, 0
    %p173 = por %p171, %p172
    %p174 = scmp.ne.s32.totalorder %s163, %s166
    %p175 = scmp.eq.s32.totalorder %s17, 1
    %p176 = por %p174, %p175
    %p177 = scmp.ne.s32.totalorder %s166, %s167
    %p178 = scmp.eq.s32.totalorder %s17, 0
    %p179 = por %p177, %p178
    %p180 = scmp.ne.s32.totalorder %s166, %s167
    %p181 = scmp.eq.s32.totalorder %s18, 1
    %p182 = por %p180, %p181
    %p184 = scmp.ne.s32.totalorder %s167, %s183
    %p185 = scmp.eq.s32.totalorder %s18, 0
    %p186 = por %p184, %p185
    %p187 = scmp.le.s32.totalorder 1, %s12
    %p188 = scmp.lt.s32.totalorder %s12, 3
    %p189 = pnand %p187, %p188
    %p190 = pneg %p189
    // Predicated region
    $region9: #{tpu_custom_call.1} parent=5 // pred_check
      _
    $region10: #{tpu_custom_call.1} parent=5 // pred_check_branch
      %192 = sbr.rel (%p189) target = $region12
    $region11: #{tpu_custom_call.1} parent=5 // pred_region
      %s193 = ssub.s32 %s12, 1
      // Predicated region
      $region13: #{tpu_custom_call.1} parent=11 // pred_check
        %p194 = pneg %p85
      $region14: #{tpu_custom_call.1} parent=11 // pred_check_branch
        %196 = sbr.rel (%p194) target = $region16
      $region15: #{tpu_custom_call.1} parent=11 // pred_region
        _
      $region16: #{tpu_custom_call.1} parent=11 // pred_fallthru
        _
      // Predicated region
      $region17: #{tpu_custom_call.1} parent=11 // pred_check
        %p197 = pneg %p106
      $region18: #{tpu_custom_call.1} parent=11 // pred_check_branch
        %199 = sbr.rel (%p197) target = $region20
      $region19: #{tpu_custom_call.1} parent=11 // pred_region
        _
      $region20: #{tpu_custom_call.1} parent=11 // pred_fallthru
        _
      // Predicated region
      $region21: #{tpu_custom_call.1} parent=11 // pred_check
        %p200 = pneg %p127
      $region22: #{tpu_custom_call.1} parent=11 // pred_check_branch
        %202 = sbr.rel (%p200) target = $region24
      $region23: #{tpu_custom_call.1} parent=11 // pred_region
        _
      $region24: #{tpu_custom_call.1} parent=11 // pred_fallthru
        _
    $region12: #{tpu_custom_call.1} parent=5 // pred_fallthru
      _
    %p203 = scmp.lt.s32.totalorder %s12, 2
    // Predicated region
    $region25: #{tpu_custom_call.1} parent=5 // pred_check
      %p204 = pneg %p203
    $region26: #{tpu_custom_call.1} parent=5 // pred_check_branch
      %206 = sbr.rel (%p204) target = $region28
    $region27: #{tpu_custom_call.1} parent=5 // pred_region
      // Predicated region
      $region29: #{tpu_custom_call.1} parent=27 // pred_check
        %p207 = pneg %p32
      $region30: #{tpu_custom_call.1} parent=27 // pred_check_branch
        %209 = sbr.rel (%p207) target = $region32
      $region31: #{tpu_custom_call.1} parent=27 // pred_region
        %s210 = smul.u32 16, %s12
        %p211 = scmp.lt.s32.totalorder %s210, 31
        %s212 = scalar_select %p211, %s210, 31
        %s213 = smul.addr %s212, 8
        %s214 = scalar_lea.vmem %s0, %s213
        %s215 = smul.u32 16, %s12
      $region32: #{tpu_custom_call.1} parent=27 // pred_fallthru
        _
      // Predicated region
      $region33: #{tpu_custom_call.1} parent=27 // pred_check
        %p216 = pneg %p58
      $region34: #{tpu_custom_call.1} parent=27 // pred_check_branch
        %218 = sbr.rel (%p216) target = $region36
      $region35: #{tpu_custom_call.1} parent=27 // pred_region
        %s219 = smul.u32 16, %s12
        %p220 = scmp.lt.s32.totalorder %s219, 31
        %s221 = scalar_select %p220, %s219, 31
        %s222 = smul.addr %s221, 8
        %s223 = scalar_lea.vmem %s1, %s222
        %s224 = smul.u32 16, %s12
      $region36: #{tpu_custom_call.1} parent=27 // pred_fallthru
        _
      // Predicated region
      $region37: #{tpu_custom_call.1} parent=27 // pred_check
        %p225 = pneg %p147
      $region38: #{tpu_custom_call.1} parent=27 // pred_check_branch
        %227 = sbr.rel (%p225) target = $region40
      $region39: #{tpu_custom_call.1} parent=27 // pred_region
        %s228 = smul.u32 16, %s12
        %p229 = scmp.lt.s32.totalorder %s228, 31
        %s230 = scalar_select %p229, %s228, 31
        %s231 = smul.addr %s230, 8
        %s232 = scalar_lea.vmem %s5, %s231
        %s233 = smul.u32 16, %s12
      $region40: #{tpu_custom_call.1} parent=27 // pred_fallthru
        _
    $region28: #{tpu_custom_call.1} parent=5 // pred_fallthru
      _
    %p234 = scmp.le.s32.totalorder 1, %s12
    %p235 = scmp.lt.s32.totalorder %s12, 3
    %p236 = pnand %p234, %p235
    %p237 = pneg %p236
    // Predicated region
    $region41: #{tpu_custom_call.1} parent=5 // pred_check
      _
    $region42: #{tpu_custom_call.1} parent=5 // pred_check_branch
      %239 = sbr.rel (%p236) target = $region44
    $region43: #{tpu_custom_call.1} parent=5 // pred_region
      %s240 = ssub.s32 %s12, 1
      %s241 = smul.u32 16, %s17
      %p242 = scmp.lt.s32.totalorder %s241, 31
      %s243 = scalar_select %p242, %s241, 31
      %s244 = smul.addr %s243, 8
      %s245 = scalar_lea.vmem %s0, %s244
      %p246 = pneg %p38
      %p247 = pneg %p35
      %s248 = smul.u32 16, %s17
      %p249 = scmp.lt.s32.totalorder %s248, 31
      %s250 = scalar_select %p249, %s248, 31
      %s251 = smul.addr %s250, 8
      %s252 = scalar_lea.vmem %s1, %s251
      %p253 = pneg %p64
      %p254 = pneg %p61
      %p255 = pneg %p85
      %p256 = pneg %p82
      %p257 = pneg %p106
      %p258 = pneg %p103
      %p259 = pneg %p127
      %p260 = pneg %p124
      %s261 = smul.u32 16, %s17
      %p262 = scmp.lt.s32.totalorder %s261, 31
      %s263 = scalar_select %p262, %s261, 31
      %s264 = smul.addr %s263, 8
      %s265 = scalar_lea.vmem %s5, %s264
      %p266 = pneg %p153
      %p267 = pneg %p150
      %p268 = pneg %p179
      %p269 = pneg %p176
      %s270 = smul.u32 16, %s17
      %p271 = scmp.lt.s32.totalorder %s270, 31
      %s272 = scalar_select %p271, %s270, 31
      %s273 = smul.addr %s272, 8
      %s274 = scalar_lea.vmem %s6, %s273
      %s275 = smul.u32 16, %s17
      %p276 = scmp.lt.s32.totalorder %s275, 31
      %s277 = scalar_select %p276, %s275, 31
      %s278 = smul.addr %s277, 8
      %s279 = scalar_lea.vmem %s0, %s278
      %s280 = smul.u32 16, %s17
      %s281 = smul.u32 16, %s17
      %p282 = scmp.lt.s32.totalorder %s281, 31
      %s283 = scalar_select %p282, %s281, 31
      %s284 = smul.addr %s283, 8
      %s285 = scalar_lea.vmem %s1, %s284
      %s286 = smul.u32 16, %s17
      %s287 = smul.u32 16, %s17
      %p288 = scmp.lt.s32.totalorder %s287, 31
      %s289 = scalar_select %p288, %s287, 31
      %s290 = smul.addr %s289, 8
      %s291 = scalar_lea.vmem %s5, %s290
      %s292 = smul.u32 16, %s17
      %s293 = smul.u32 16, %s17
      %p294 = scmp.lt.s32.totalorder %s293, 31
      %s295 = scalar_select %p294, %s293, 31
      %s296 = smul.addr %s295, 8
      %s297 = scalar_lea.vmem %s6, %s296
      %s298 = smul.u32 16, %s17
      %v299 = vld [vmem:[%s279] sm:$0xff]
      %v300 = vld [vmem:[%s279 + $0x8] sm:$0xff]
      %v301 = vld [vmem:[%s279 + $0x10] sm:$0xff]
      %v302 = vld [vmem:[%s279 + $0x18] sm:$0xff]
      %v303 = vld [vmem:[%s279 + $0x20] sm:$0xff]
      %v304 = vld [vmem:[%s279 + $0x28] sm:$0xff]
      %v305 = vld [vmem:[%s279 + $0x30] sm:$0xff]
      %v306 = vld [vmem:[%s279 + $0x38] sm:$0xff]
      %v307 = vld [vmem:[%s279 + $0x40] sm:$0xff]
      %v308 = vld [vmem:[%s279 + $0x48] sm:$0xff]
      %v309 = vld [vmem:[%s279 + $0x50] sm:$0xff]
      %v310 = vld [vmem:[%s279 + $0x58] sm:$0xff]
      %v311 = vld [vmem:[%s279 + $0x60] sm:$0xff]
      %v312 = vld [vmem:[%s279 + $0x68] sm:$0xff]
      %v313 = vld [vmem:[%s279 + $0x70] sm:$0xff]
      %v314 = vld [vmem:[%s279 + $0x78] sm:$0xff]
      %v315 = vld [vmem:[%s2] sm:$0x7]
      %vm316 = vcmask 23552
      %v318 = vsel %vm316, %v299, 0
      %v321 = vsel %vm316, %v300, 0
      %v324 = vsel %vm316, %v301, 0
      %v327 = vsel %vm316, %v302, 0
      %v330 = vsel %vm316, %v303, 0
      %v333 = vsel %vm316, %v304, 0
      %v336 = vsel %vm316, %v305, 0
      %v339 = vsel %vm316, %v306, 0
      %v342 = vsel %vm316, %v307, 0
      %v345 = vsel %vm316, %v308, 0
      %v348 = vsel %vm316, %v309, 0
      %v351 = vsel %vm316, %v310, 0
      %v354 = vsel %vm316, %v311, 0
      %v357 = vsel %vm316, %v312, 0
      %v360 = vsel %vm316, %v313, 0
      %v363 = vsel %vm316, %v314, 0
      %vm365 = vcmask 1042432
      %v367 = vsel %vm365, %v315, 0
      %369 = vmatprep.subr.mxu0 0.0
      %370 = vmatpush1.msra.mxu0 %v367
      %371 = vmatprep.subr.mxu0 0.0
      %372 = vmatpush1.msra.mxu0 0.0
      %373 = vmatprep.subr.mxu0 0.0
      %374 = vmatpush1.msra.mxu0 0.0
      %375 = vmatprep.subr.mxu0 0.0
      %376 = vmatpush1.msra.mxu0 0.0
      %377 = vmatprep.subr.mxu0 0.0
      %378 = vmatpush1.msra.mxu0 0.0
      %379 = vmatprep.subr.mxu0 0.0
      %380 = vmatpush1.msra.mxu0 0.0
      %381 = vmatprep.subr.mxu0 0.0
      %382 = vmatpush1.msra.mxu0 0.0
      %383 = vmatprep.subr.mxu0 0.0
      %384 = vmatpush1.msra.mxu0 0.0
      %385 = vmatprep.subr.mxu0 0.0
      %386 = vmatpush1.msra.mxu0 0.0
      %387 = vmatprep.subr.mxu0 0.0
      %388 = vmatpush1.msra.mxu0 0.0
      %389 = vmatprep.subr.mxu0 0.0
      %390 = vmatpush1.msra.mxu0 0.0
      %391 = vmatprep.subr.mxu0 0.0
      %392 = vmatpush1.msra.mxu0 0.0
      %393 = vmatprep.subr.mxu0 0.0
      %394 = vmatpush1.msra.mxu0 0.0
      %395 = vmatprep.subr.mxu0 0.0
      %396 = vmatpush1.msra.mxu0 0.0
      %397 = vmatprep.subr.mxu0 0.0
      %398 = vmatpush1.msra.mxu0 0.0
      %399 = vmatprep.subr.mxu0 0.0
      %400 = vmatpush1.msra.mxu0 0.0
      %401 = vmatprep.subr.mxu0 0.0
      %402 = vmatpush1.msra.mxu0 0.0
      %403 = vmatprep.subr.mxu0 0.0
      %404 = vmatpush1.msra.mxu0 0.0
      %405 = vmatprep.subr.mxu0 0.0
      %406 = vmatpush1.msra.mxu0 0.0
      %407 = vmatprep.subr.mxu0 0.0
      %408 = vmatpush1.msra.mxu0 0.0
      %409 = vmatprep.subr.mxu0 0.0
      %410 = vmatpush1.msra.mxu0 0.0
      %411 = vmatprep.subr.mxu0 0.0
      %412 = vmatpush1.msra.mxu0 0.0
      %413 = vmatprep.subr.mxu0 0.0
      %414 = vmatpush1.msra.mxu0 0.0
      %415 = vmatprep.subr.mxu0 0.0
      %416 = vmatpush1.msra.mxu0 0.0
      %417 = vmatprep.subr.mxu0 0.0
      %418 = vmatpush1.msra.mxu0 0.0
      %419 = vmatprep.subr.mxu0 0.0
      %420 = vmatpush1.msra.mxu0 0.0
      %421 = vmatprep.subr.mxu0 0.0
      %422 = vmatpush1.msra.mxu0 0.0
      %423 = vmatprep.subr.mxu0 0.0
      %424 = vmatpush1.msra.mxu0 0.0
      %425 = vmatprep.subr.mxu0 0.0
      %426 = vmatpush1.msra.mxu0 0.0
      %427 = vmatprep.subr.mxu0 0.0
      %428 = vmatpush1.msra.mxu0 0.0
      %429 = vmatprep.subr.mxu0 0.0
      %430 = vmatpush1.msra.mxu0 0.0
      %431 = vmatprep.subr.mxu0 0.0
      %432 = vmatpush1.msra.mxu0 0.0
      %433 = vmatprep.mubr.f32.mxu0 0.0
      %434 = vmatmul.mubr.f32.gmra.mrb[0].mxu0 %v318
      %v435 = vpop.f32.mrb[0].mxu0
      %v436 = vadd.f32 0.0, %v435
      %v437 = vpop.f32.mrb[0].mxu0
      %438 = vmatprep.mubr.f32.mxu0 0.0
      %439 = vmatmul.mubr.f32.gmra.mrb[0].mxu0 %v321
      %v440 = vpop.f32.mrb[0].mxu0
      %v441 = vadd.f32 0.0, %v440
      %v442 = vpop.f32.mrb[0].mxu0
      %443 = vmatprep.mubr.f32.mxu0 0.0
      %444 = vmatmul.mubr.f32.gmra.mrb[0].mxu0 %v324
      %v445 = vpop.f32.mrb[0].mxu0
      %v446 = vadd.f32 0.0, %v445
      %v447 = vpop.f32.mrb[0].mxu0
      %448 = vmatprep.mubr.f32.mxu0 0.0
      %449 = vmatmul.mubr.f32.gmra.mrb[0].mxu0 %v327
      %v450 = vpop.f32.mrb[0].mxu0
      %v451 = vadd.f32 0.0, %v450
      %v452 = vpop.f32.mrb[0].mxu0
      %453 = vmatprep.mubr.f32.mxu0 0.0
      %454 = vmatmul.mubr.f32.gmra.mrb[0].mxu0 %v330
      %v455 = vpop.f32.mrb[0].mxu0
      %v456 = vadd.f32 0.0, %v455
      %v457 = vpop.f32.mrb[0].mxu0
      %458 = vmatprep.mubr.f32.mxu0 0.0
      %459 = vmatmul.mubr.f32.gmra.mrb[0].mxu0 %v333
      %v460 = vpop.f32.mrb[0].mxu0
      %v461 = vadd.f32 0.0, %v460
      %v462 = vpop.f32.mrb[0].mxu0
      %463 = vmatprep.mubr.f32.mxu0 0.0
      %464 = vmatmul.mubr.f32.gmra.mrb[0].mxu0 %v336
      %v465 = vpop.f32.mrb[0].mxu0
      %v466 = vadd.f32 0.0, %v465
      %v467 = vpop.f32.mrb[0].mxu0
      %468 = vmatprep.mubr.f32.mxu0 0.0
      %469 = vmatmul.mubr.f32.gmra.mrb[0].mxu0 %v339
      %v470 = vpop.f32.mrb[0].mxu0
      %v471 = vadd.f32 0.0, %v470
      %v472 = vpop.f32.mrb[0].mxu0
      %473 = vmatprep.mubr.f32.mxu0 0.0
      %474 = vmatmul.mubr.f32.gmra.mrb[0].mxu0 %v342
      %v475 = vpop.f32.mrb[0].mxu0
      %v476 = vadd.f32 0.0, %v475
      %v477 = vpop.f32.mrb[0].mxu0
      %478 = vmatprep.mubr.f32.mxu0 0.0
      %479 = vmatmul.mubr.f32.gmra.mrb[0].mxu0 %v345
      %v480 = vpop.f32.mrb[0].mxu0
      %v481 = vadd.f32 0.0, %v480
      %v482 = vpop.f32.mrb[0].mxu0
      %483 = vmatprep.mubr.f32.mxu0 0.0
      %484 = vmatmul.mubr.f32.gmra.mrb[0].mxu0 %v348
      %v485 = vpop.f32.mrb[0].mxu0
      %v486 = vadd.f32 0.0, %v485
      %v487 = vpop.f32.mrb[0].mxu0
      %488 = vmatprep.mubr.f32.mxu0 0.0
      %489 = vmatmul.mubr.f32.gmra.mrb[0].mxu0 %v351
      %v490 = vpop.f32.mrb[0].mxu0
      %v491 = vadd.f32 0.0, %v490
      %v492 = vpop.f32.mrb[0].mxu0
      %493 = vmatprep.mubr.f32.mxu0 0.0
      %494 = vmatmul.mubr.f32.gmra.mrb[0].mxu0 %v354
      %v495 = vpop.f32.mrb[0].mxu0
      %v496 = vadd.f32 0.0, %v495
      %v497 = vpop.f32.mrb[0].mxu0
      %498 = vmatprep.mubr.f32.mxu0 0.0
      %499 = vmatmul.mubr.f32.gmra.mrb[0].mxu0 %v357
      %v500 = vpop.f32.mrb[0].mxu0
      %v501 = vadd.f32 0.0, %v500
      %v502 = vpop.f32.mrb[0].mxu0
      %503 = vmatprep.mubr.f32.mxu0 0.0
      %504 = vmatmul.mubr.f32.gmra.mrb[0].mxu0 %v360
      %v505 = vpop.f32.mrb[0].mxu0
      %v506 = vadd.f32 0.0, %v505
      %v507 = vpop.f32.mrb[0].mxu0
      %508 = vmatprep.mubr.f32.mxu0 0.0
      %509 = vmatmul.mubr.f32.gmra.mrb[0].mxu0 %v363
      %v510 = vpop.f32.mrb[0].mxu0
      %v511 = vadd.f32 0.0, %v510
      %v512 = vpop.f32.mrb[0].mxu0
      %513 = vdwg.mxu0
      %v514 = vmul.f32 %v299, %v299
      %v515 = vmul.f32 %v300, %v300
      %v516 = vmul.f32 %v301, %v301
      %v517 = vmul.f32 %v302, %v302
      %v518 = vmul.f32 %v303, %v303
      %v519 = vmul.f32 %v304, %v304
      %v520 = vmul.f32 %v305, %v305
      %v521 = vmul.f32 %v306, %v306
      %v522 = vmul.f32 %v307, %v307
      %v523 = vmul.f32 %v308, %v308
      %v524 = vmul.f32 %v309, %v309
      %v525 = vmul.f32 %v310, %v310
      %v526 = vmul.f32 %v311, %v311
      %v527 = vmul.f32 %v312, %v312
      %v528 = vmul.f32 %v313, %v313
      %v529 = vmul.f32 %v314, %v314
      %v530 = vsel %vm316, %v514, 0.0
      %531 = vadd.xlane.f32.xlu0 %v530
      %v532 = vpop.xlane.xlu0 %531
      %v533 = vsel %vm316, %v515, 0.0
      %534 = vadd.xlane.f32.xlu0 %v533
      %v535 = vpop.xlane.xlu0 %534
      %v536 = vsel %vm316, %v516, 0.0
      %537 = vadd.xlane.f32.xlu0 %v536
      %v538 = vpop.xlane.xlu0 %537
      %v539 = vsel %vm316, %v517, 0.0
      %540 = vadd.xlane.f32.xlu0 %v539
      %v541 = vpop.xlane.xlu0 %540
      %v542 = vsel %vm316, %v518, 0.0
      %543 = vadd.xlane.f32.xlu0 %v542
      %v544 = vpop.xlane.xlu0 %543
      %v545 = vsel %vm316, %v519, 0.0
      %546 = vadd.xlane.f32.xlu0 %v545
      %v547 = vpop.xlane.xlu0 %546
      %v548 = vsel %vm316, %v520, 0.0
      %549 = vadd.xlane.f32.xlu0 %v548
      %v550 = vpop.xlane.xlu0 %549
      %v551 = vsel %vm316, %v521, 0.0
      %552 = vadd.xlane.f32.xlu0 %v551
      %v553 = vpop.xlane.xlu0 %552
      %v554 = vsel %vm316, %v522, 0.0
      %555 = vadd.xlane.f32.xlu0 %v554
      %v556 = vpop.xlane.xlu0 %555
      %v557 = vsel %vm316, %v523, 0.0
      %558 = vadd.xlane.f32.xlu0 %v557
      %v559 = vpop.xlane.xlu0 %558
      %v560 = vsel %vm316, %v524, 0.0
      %561 = vadd.xlane.f32.xlu0 %v560
      %v562 = vpop.xlane.xlu0 %561
      %v563 = vsel %vm316, %v525, 0.0
      %564 = vadd.xlane.f32.xlu0 %v563
      %v565 = vpop.xlane.xlu0 %564
      %v566 = vsel %vm316, %v526, 0.0
      %567 = vadd.xlane.f32.xlu0 %v566
      %v568 = vpop.xlane.xlu0 %567
      %v569 = vsel %vm316, %v527, 0.0
      %570 = vadd.xlane.f32.xlu0 %v569
      %v571 = vpop.xlane.xlu0 %570
      %v572 = vsel %vm316, %v528, 0.0
      %573 = vadd.xlane.f32.xlu0 %v572
      %v574 = vpop.xlane.xlu0 %573
      %v575 = vsel %vm316, %v529, 0.0
      %576 = vadd.xlane.f32.xlu0 %v575
      %v577 = vpop.xlane.xlu0 %576
      %v578 = vmul.f32 %v315, %v315
      %vm579 = vcmask 518144
      %v580 = vsel %vm579, %v578, 0.0
      %v581 = vrot.slane %v580, 4
      %v582 = vadd.f32 %v580, %v581
      %v583 = vrot.slane %v582, 2
      %v584 = vadd.f32 %v582, %v583
      %v585 = vrot.slane %v584, 1
      %v586 = vadd.f32 %v584, %v585
      %v587 = vadd.f32 %v532, %v586
      %v588 = vadd.f32 %v535, %v586
      %v589 = vadd.f32 %v538, %v586
      %v590 = vadd.f32 %v541, %v586
      %v591 = vadd.f32 %v544, %v586
      %v592 = vadd.f32 %v547, %v586
      %v593 = vadd.f32 %v550, %v586
      %v594 = vadd.f32 %v553, %v586
      %v595 = vadd.f32 %v556, %v586
      %v596 = vadd.f32 %v559, %v586
      %v597 = vadd.f32 %v562, %v586
      %v598 = vadd.f32 %v565, %v586
      %v599 = vadd.f32 %v568, %v586
      %v600 = vadd.f32 %v571, %v586
      %v601 = vadd.f32 %v574, %v586
      %v602 = vadd.f32 %v577, %v586
      %v603 = vmul.f32 %v436, 2.0
      %v604 = vmul.f32 %v441, 2.0
      %v605 = vmul.f32 %v446, 2.0
      %v606 = vmul.f32 %v451, 2.0
      %v607 = vmul.f32 %v456, 2.0
      %v608 = vmul.f32 %v461, 2.0
      %v609 = vmul.f32 %v466, 2.0
      %v610 = vmul.f32 %v471, 2.0
      %v611 = vmul.f32 %v476, 2.0
      %v612 = vmul.f32 %v481, 2.0
      %v613 = vmul.f32 %v486, 2.0
      %v614 = vmul.f32 %v491, 2.0
      %v615 = vmul.f32 %v496, 2.0
      %v616 = vmul.f32 %v501, 2.0
      %v617 = vmul.f32 %v506, 2.0
      %v618 = vmul.f32 %v511, 2.0
      %v619 = vsub.f32 %v587, %v603
      %v620 = vsub.f32 %v588, %v604
      %v621 = vsub.f32 %v589, %v605
      %v622 = vsub.f32 %v590, %v606
      %v623 = vsub.f32 %v591, %v607
      %v624 = vsub.f32 %v592, %v608
      %v625 = vsub.f32 %v593, %v609
      %v626 = vsub.f32 %v594, %v610
      %v627 = vsub.f32 %v595, %v611
      %v628 = vsub.f32 %v596, %v612
      %v629 = vsub.f32 %v597, %v613
      %v630 = vsub.f32 %v598, %v614
      %v631 = vsub.f32 %v599, %v615
      %v632 = vsub.f32 %v600, %v616
      %v633 = vsub.f32 %v601, %v617
      %v634 = vsub.f32 %v602, %v618
      %v635 = vmax.f32 %v619, 0.0
      %v636 = vmax.f32 %v620, 0.0
      %v637 = vmax.f32 %v621, 0.0
      %v638 = vmax.f32 %v622, 0.0
      %v639 = vmax.f32 %v623, 0.0
      %v640 = vmax.f32 %v624, 0.0
      %v641 = vmax.f32 %v625, 0.0
      %v642 = vmax.f32 %v626, 0.0
      %v643 = vmax.f32 %v627, 0.0
      %v644 = vmax.f32 %v628, 0.0
      %v645 = vmax.f32 %v629, 0.0
      %v646 = vmax.f32 %v630, 0.0
      %v647 = vmax.f32 %v631, 0.0
      %v648 = vmax.f32 %v632, 0.0
      %v649 = vmax.f32 %v633, 0.0
      %v650 = vmax.f32 %v634, 0.0
      %v651 = vld [vmem:[%s285] sm:$0xff]
      %v652 = vld [vmem:[%s285 + $0x8] sm:$0xff]
      %v653 = vld [vmem:[%s285 + $0x10] sm:$0xff]
      %v654 = vld [vmem:[%s285 + $0x18] sm:$0xff]
      %v655 = vld [vmem:[%s285 + $0x20] sm:$0xff]
      %v656 = vld [vmem:[%s285 + $0x28] sm:$0xff]
      %v657 = vld [vmem:[%s285 + $0x30] sm:$0xff]
      %v658 = vld [vmem:[%s285 + $0x38] sm:$0xff]
      %v659 = vld [vmem:[%s285 + $0x40] sm:$0xff]
      %v660 = vld [vmem:[%s285 + $0x48] sm:$0xff]
      %v661 = vld [vmem:[%s285 + $0x50] sm:$0xff]
      %v662 = vld [vmem:[%s285 + $0x58] sm:$0xff]
      %v663 = vld [vmem:[%s285 + $0x60] sm:$0xff]
      %v664 = vld [vmem:[%s285 + $0x68] sm:$0xff]
      %v665 = vld [vmem:[%s285 + $0x70] sm:$0xff]
      %v666 = vld [vmem:[%s285 + $0x78] sm:$0xff]
      %v667 = vld [vmem:[%s3] sm:$0x1]
      %668 = vset.pattern.permute.xlu0 0
      %669 = vperm.xlu0 %668, %v651
      %v670 = vpop.permute.xlu0 %669
      %671 = vset.pattern.permute.xlu0 0
      %672 = vperm.xlu0 %671, %v652
      %v673 = vpop.permute.xlu0 %672
      %674 = vset.pattern.permute.xlu0 0
      %675 = vperm.xlu0 %674, %v653
      %v676 = vpop.permute.xlu0 %675
      %677 = vset.pattern.permute.xlu0 0
      %678 = vperm.xlu0 %677, %v654
      %v679 = vpop.permute.xlu0 %678
      %680 = vset.pattern.permute.xlu0 0
      %681 = vperm.xlu0 %680, %v655
      %v682 = vpop.permute.xlu0 %681
      %683 = vset.pattern.permute.xlu0 0
      %684 = vperm.xlu0 %683, %v656
      %v685 = vpop.permute.xlu0 %684
      %686 = vset.pattern.permute.xlu0 0
      %687 = vperm.xlu0 %686, %v657
      %v688 = vpop.permute.xlu0 %687
      %689 = vset.pattern.permute.xlu0 0
      %690 = vperm.xlu0 %689, %v658
      %v691 = vpop.permute.xlu0 %690
      %692 = vset.pattern.permute.xlu0 0
      %693 = vperm.xlu0 %692, %v659
      %v694 = vpop.permute.xlu0 %693
      %695 = vset.pattern.permute.xlu0 0
      %696 = vperm.xlu0 %695, %v660
      %v697 = vpop.permute.xlu0 %696
      %698 = vset.pattern.permute.xlu0 0
      %699 = vperm.xlu0 %698, %v661
      %v700 = vpop.permute.xlu0 %699
      %701 = vset.pattern.permute.xlu0 0
      %702 = vperm.xlu0 %701, %v662
      %v703 = vpop.permute.xlu0 %702
      %704 = vset.pattern.permute.xlu0 0
      %705 = vperm.xlu0 %704, %v663
      %v706 = vpop.permute.xlu0 %705
      %707 = vset.pattern.permute.xlu0 0
      %708 = vperm.xlu0 %707, %v664
      %v709 = vpop.permute.xlu0 %708
      %710 = vset.pattern.permute.xlu0 0
      %711 = vperm.xlu0 %710, %v665
      %v712 = vpop.permute.xlu0 %711
      %713 = vset.pattern.permute.xlu0 0
      %714 = vperm.xlu0 %713, %v666
      %v715 = vpop.permute.xlu0 %714
      %v716 = vlaneseq
      %v717 = vshrl.u32 %v716, 7
      %v718 = vsub.s32 0, %v717
      %v719 = vrot.slane %v667, %v718
      %vm720 = vcmp.eq.s32.totalorder %v670, %v719
      %vm721 = vcmp.eq.s32.totalorder %v673, %v719
      %vm722 = vcmp.eq.s32.totalorder %v676, %v719
      %vm723 = vcmp.eq.s32.totalorder %v679, %v719
      %vm724 = vcmp.eq.s32.totalorder %v682, %v719
      %vm725 = vcmp.eq.s32.totalorder %v685, %v719
      %vm726 = vcmp.eq.s32.totalorder %v688, %v719
      %vm727 = vcmp.eq.s32.totalorder %v691, %v719
      %vm728 = vcmp.eq.s32.totalorder %v694, %v719
      %vm729 = vcmp.eq.s32.totalorder %v697, %v719
      %vm730 = vcmp.eq.s32.totalorder %v700, %v719
      %vm731 = vcmp.eq.s32.totalorder %v703, %v719
      %vm732 = vcmp.eq.s32.totalorder %v706, %v719
      %vm733 = vcmp.eq.s32.totalorder %v709, %v719
      %vm734 = vcmp.eq.s32.totalorder %v712, %v719
      %vm735 = vcmp.eq.s32.totalorder %v715, %v719
      %v736 = vsel %vm720, %v635, 1e+10
      %v737 = vsel %vm721, %v636, 1e+10
      %v738 = vsel %vm722, %v637, 1e+10
      %v739 = vsel %vm723, %v638, 1e+10
      %v740 = vsel %vm724, %v639, 1e+10
      %v741 = vsel %vm725, %v640, 1e+10
      %v742 = vsel %vm726, %v641, 1e+10
      %v743 = vsel %vm727, %v642, 1e+10
      %v744 = vsel %vm728, %v643, 1e+10
      %v745 = vsel %vm729, %v644, 1e+10
      %v746 = vsel %vm730, %v645, 1e+10
      %v747 = vsel %vm731, %v646, 1e+10
      %v748 = vsel %vm732, %v647, 1e+10
      %v749 = vsel %vm733, %v648, 1e+10
      %v750 = vsel %vm734, %v649, 1e+10
      %v751 = vsel %vm735, %v650, 1e+10
      %v752 = vlaneseq
      %v753 = vand.u32 %v752, 127
      %vm754 = vcmask 523264
      %v755 = vsel %vm754, %v736, inf
      %756 = vmin.xlane.f32.xlu0 %v755
      %v757 = vpop.xlane.xlu0 %756
      %v758 = vsel %vm754, %v737, inf
      %759 = vmin.xlane.f32.xlu0 %v758
      %v760 = vpop.xlane.xlu0 %759
      %v761 = vsel %vm754, %v738, inf
      %762 = vmin.xlane.f32.xlu0 %v761
      %v763 = vpop.xlane.xlu0 %762
      %v764 = vsel %vm754, %v739, inf
      %765 = vmin.xlane.f32.xlu0 %v764
      %v766 = vpop.xlane.xlu0 %765
      %v767 = vsel %vm754, %v740, inf
      %768 = vmin.xlane.f32.xlu0 %v767
      %v769 = vpop.xlane.xlu0 %768
      %v770 = vsel %vm754, %v741, inf
      %771 = vmin.xlane.f32.xlu0 %v770
      %v772 = vpop.xlane.xlu0 %771
      %v773 = vsel %vm754, %v742, inf
      %774 = vmin.xlane.f32.xlu0 %v773
      %v775 = vpop.xlane.xlu0 %774
      %v776 = vsel %vm754, %v743, inf
      %777 = vmin.xlane.f32.xlu0 %v776
      %v778 = vpop.xlane.xlu0 %777
      %v779 = vsel %vm754, %v744, inf
      %780 = vmin.xlane.f32.xlu0 %v779
      %v781 = vpop.xlane.xlu0 %780
      %v782 = vsel %vm754, %v745, inf
      %783 = vmin.xlane.f32.xlu0 %v782
      %v784 = vpop.xlane.xlu0 %783
      %v785 = vsel %vm754, %v746, inf
      %786 = vmin.xlane.f32.xlu0 %v785
      %v787 = vpop.xlane.xlu0 %786
      %v788 = vsel %vm754, %v747, inf
      %789 = vmin.xlane.f32.xlu0 %v788
      %v790 = vpop.xlane.xlu0 %789
      %v791 = vsel %vm754, %v748, inf
      %792 = vmin.xlane.f32.xlu0 %v791
      %v793 = vpop.xlane.xlu0 %792
      %v794 = vsel %vm754, %v749, inf
      %795 = vmin.xlane.f32.xlu0 %v794
      %v796 = vpop.xlane.xlu0 %795
      %v797 = vsel %vm754, %v750, inf
      %798 = vmin.xlane.f32.xlu0 %v797
      %v799 = vpop.xlane.xlu0 %798
      %v800 = vsel %vm754, %v751, inf
      %801 = vmin.xlane.f32.xlu0 %v800
      %v802 = vpop.xlane.xlu0 %801
      %vm803 = vcmp.eq.f32.partialorder %v736, %v757
      %vm804 = vcmp.eq.f32.partialorder %v737, %v760
      %vm805 = vcmp.eq.f32.partialorder %v738, %v763
      %vm806 = vcmp.eq.f32.partialorder %v739, %v766
      %vm807 = vcmp.eq.f32.partialorder %v740, %v769
      %vm808 = vcmp.eq.f32.partialorder %v741, %v772
      %vm809 = vcmp.eq.f32.partialorder %v742, %v775
      %vm810 = vcmp.eq.f32.partialorder %v743, %v778
      %vm811 = vcmp.eq.f32.partialorder %v744, %v781
      %vm812 = vcmp.eq.f32.partialorder %v745, %v784
      %vm813 = vcmp.eq.f32.partialorder %v746, %v787
      %vm814 = vcmp.eq.f32.partialorder %v747, %v790
      %vm815 = vcmp.eq.f32.partialorder %v748, %v793
      %vm816 = vcmp.eq.f32.partialorder %v749, %v796
      %vm817 = vcmp.eq.f32.partialorder %v750, %v799
      %vm818 = vcmp.eq.f32.partialorder %v751, %v802
      %v819 = vsel %vm803, %v753, 64
      %v820 = vsel %vm804, %v753, 64
      %v821 = vsel %vm805, %v753, 64
      %v822 = vsel %vm806, %v753, 64
      %v823 = vsel %vm807, %v753, 64
      %v824 = vsel %vm808, %v753, 64
      %v825 = vsel %vm809, %v753, 64
      %v826 = vsel %vm810, %v753, 64
      %v827 = vsel %vm811, %v753, 64
      %v828 = vsel %vm812, %v753, 64
      %v829 = vsel %vm813, %v753, 64
      %v830 = vsel %vm814, %v753, 64
      %v831 = vsel %vm815, %v753, 64
      %v832 = vsel %vm816, %v753, 64
      %v833 = vsel %vm817, %v753, 64
      %v834 = vsel %vm818, %v753, 64
      %v835 = vsel %vm754, %v819, 2147483647
      %v836 = vand.u32 %v835, 65535
      %v837 = vshra.s32 %v835, 16
      %v838 = vcvt.s32.f32 %v836
      %v839 = vcvt.s32.f32 %v837
      %840 = vmin.xlane.f32.xlu0 %v839
      %v841 = vpop.xlane.xlu0 %840
      %vm842 = vcmp.eq.f32.partialorder %v839, %v841
      %v843 = vsel %vm842, %v838, inf
      %844 = vmin.xlane.f32.xlu0 %v843
      %v845 = vpop.xlane.xlu0 %844
      %v846 = vcvt.f32.s32 %v845
      %v847 = vcvt.f32.s32 %v841
      %v848 = vshll.u32 %v847, 16
      %v849 = vadd.s32 %v848, %v846
      %v850 = vsel %vm754, %v820, 2147483647
      %v851 = vand.u32 %v850, 65535
      %v852 = vshra.s32 %v850, 16
      %v853 = vcvt.s32.f32 %v851
      %v854 = vcvt.s32.f32 %v852
      %855 = vmin.xlane.f32.xlu0 %v854
      %v856 = vpop.xlane.xlu0 %855
      %vm857 = vcmp.eq.f32.partialorder %v854, %v856
      %v858 = vsel %vm857, %v853, inf
      %859 = vmin.xlane.f32.xlu0 %v858
      %v860 = vpop.xlane.xlu0 %859
      %v861 = vcvt.f32.s32 %v860
      %v862 = vcvt.f32.s32 %v856
      %v863 = vshll.u32 %v862, 16
      %v864 = vadd.s32 %v863, %v861
      %v865 = vsel %vm754, %v821, 2147483647
      %v866 = vand.u32 %v865, 65535
      %v867 = vshra.s32 %v865, 16
      %v868 = vcvt.s32.f32 %v866
      %v869 = vcvt.s32.f32 %v867
      %870 = vmin.xlane.f32.xlu0 %v869
      %v871 = vpop.xlane.xlu0 %870
      %vm872 = vcmp.eq.f32.partialorder %v869, %v871
      %v873 = vsel %vm872, %v868, inf
      %874 = vmin.xlane.f32.xlu0 %v873
      %v875 = vpop.xlane.xlu0 %874
      %v876 = vcvt.f32.s32 %v875
      %v877 = vcvt.f32.s32 %v871
      %v878 = vshll.u32 %v877, 16
      %v879 = vadd.s32 %v878, %v876
      %v880 = vsel %vm754, %v822, 2147483647
      %v881 = vand.u32 %v880, 65535
      %v882 = vshra.s32 %v880, 16
      %v883 = vcvt.s32.f32 %v881
      %v884 = vcvt.s32.f32 %v882
      %885 = vmin.xlane.f32.xlu0 %v884
      %v886 = vpop.xlane.xlu0 %885
      %vm887 = vcmp.eq.f32.partialorder %v884, %v886
      %v888 = vsel %vm887, %v883, inf
      %889 = vmin.xlane.f32.xlu0 %v888
      %v890 = vpop.xlane.xlu0 %889
      %v891 = vcvt.f32.s32 %v890
      %v892 = vcvt.f32.s32 %v886
      %v893 = vshll.u32 %v892, 16
      %v894 = vadd.s32 %v893, %v891
      %v895 = vsel %vm754, %v823, 2147483647
      %v896 = vand.u32 %v895, 65535
      %v897 = vshra.s32 %v895, 16
      %v898 = vcvt.s32.f32 %v896
      %v899 = vcvt.s32.f32 %v897
      %900 = vmin.xlane.f32.xlu0 %v899
      %v901 = vpop.xlane.xlu0 %900
      %vm902 = vcmp.eq.f32.partialorder %v899, %v901
      %v903 = vsel %vm902, %v898, inf
      %904 = vmin.xlane.f32.xlu0 %v903
      %v905 = vpop.xlane.xlu0 %904
      %v906 = vcvt.f32.s32 %v905
      %v907 = vcvt.f32.s32 %v901
      %v908 = vshll.u32 %v907, 16
      %v909 = vadd.s32 %v908, %v906
      %v910 = vsel %vm754, %v824, 2147483647
      %v911 = vand.u32 %v910, 65535
      %v912 = vshra.s32 %v910, 16
      %v913 = vcvt.s32.f32 %v911
      %v914 = vcvt.s32.f32 %v912
      %915 = vmin.xlane.f32.xlu0 %v914
      %v916 = vpop.xlane.xlu0 %915
      %vm917 = vcmp.eq.f32.partialorder %v914, %v916
      %v918 = vsel %vm917, %v913, inf
      %919 = vmin.xlane.f32.xlu0 %v918
      %v920 = vpop.xlane.xlu0 %919
      %v921 = vcvt.f32.s32 %v920
      %v922 = vcvt.f32.s32 %v916
      %v923 = vshll.u32 %v922, 16
      %v924 = vadd.s32 %v923, %v921
      %v925 = vsel %vm754, %v825, 2147483647
      %v926 = vand.u32 %v925, 65535
      %v927 = vshra.s32 %v925, 16
      %v928 = vcvt.s32.f32 %v926
      %v929 = vcvt.s32.f32 %v927
      %930 = vmin.xlane.f32.xlu0 %v929
      %v931 = vpop.xlane.xlu0 %930
      %vm932 = vcmp.eq.f32.partialorder %v929, %v931
      %v933 = vsel %vm932, %v928, inf
      %934 = vmin.xlane.f32.xlu0 %v933
      %v935 = vpop.xlane.xlu0 %934
      %v936 = vcvt.f32.s32 %v935
      %v937 = vcvt.f32.s32 %v931
      %v938 = vshll.u32 %v937, 16
      %v939 = vadd.s32 %v938, %v936
      %v940 = vsel %vm754, %v826, 2147483647
      %v941 = vand.u32 %v940, 65535
      %v942 = vshra.s32 %v940, 16
      %v943 = vcvt.s32.f32 %v941
      %v944 = vcvt.s32.f32 %v942
      %945 = vmin.xlane.f32.xlu0 %v944
      %v946 = vpop.xlane.xlu0 %945
      %vm947 = vcmp.eq.f32.partialorder %v944, %v946
      %v948 = vsel %vm947, %v943, inf
      %949 = vmin.xlane.f32.xlu0 %v948
      %v950 = vpop.xlane.xlu0 %949
      %v951 = vcvt.f32.s32 %v950
      %v952 = vcvt.f32.s32 %v946
      %v953 = vshll.u32 %v952, 16
      %v954 = vadd.s32 %v953, %v951
      %v955 = vsel %vm754, %v827, 2147483647
      %v956 = vand.u32 %v955, 65535
      %v957 = vshra.s32 %v955, 16
      %v958 = vcvt.s32.f32 %v956
      %v959 = vcvt.s32.f32 %v957
      %960 = vmin.xlane.f32.xlu0 %v959
      %v961 = vpop.xlane.xlu0 %960
      %vm962 = vcmp.eq.f32.partialorder %v959, %v961
      %v963 = vsel %vm962, %v958, inf
      %964 = vmin.xlane.f32.xlu0 %v963
      %v965 = vpop.xlane.xlu0 %964
      %v966 = vcvt.f32.s32 %v965
      %v967 = vcvt.f32.s32 %v961
      %v968 = vshll.u32 %v967, 16
      %v969 = vadd.s32 %v968, %v966
      %v970 = vsel %vm754, %v828, 2147483647
      %v971 = vand.u32 %v970, 65535
      %v972 = vshra.s32 %v970, 16
      %v973 = vcvt.s32.f32 %v971
      %v974 = vcvt.s32.f32 %v972
      %975 = vmin.xlane.f32.xlu0 %v974
      %v976 = vpop.xlane.xlu0 %975
      %vm977 = vcmp.eq.f32.partialorder %v974, %v976
      %v978 = vsel %vm977, %v973, inf
      %979 = vmin.xlane.f32.xlu0 %v978
      %v980 = vpop.xlane.xlu0 %979
      %v981 = vcvt.f32.s32 %v980
      %v982 = vcvt.f32.s32 %v976
      %v983 = vshll.u32 %v982, 16
      %v984 = vadd.s32 %v983, %v981
      %v985 = vsel %vm754, %v829, 2147483647
      %v986 = vand.u32 %v985, 65535
      %v987 = vshra.s32 %v985, 16
      %v988 = vcvt.s32.f32 %v986
      %v989 = vcvt.s32.f32 %v987
      %990 = vmin.xlane.f32.xlu0 %v989
      %v991 = vpop.xlane.xlu0 %990
      %vm992 = vcmp.eq.f32.partialorder %v989, %v991
      %v993 = vsel %vm992, %v988, inf
      %994 = vmin.xlane.f32.xlu0 %v993
      %v995 = vpop.xlane.xlu0 %994
      %v996 = vcvt.f32.s32 %v995
      %v997 = vcvt.f32.s32 %v991
      %v998 = vshll.u32 %v997, 16
      %v999 = vadd.s32 %v998, %v996
      %v1000 = vsel %vm754, %v830, 2147483647
      %v1001 = vand.u32 %v1000, 65535
      %v1002 = vshra.s32 %v1000, 16
      %v1003 = vcvt.s32.f32 %v1001
      %v1004 = vcvt.s32.f32 %v1002
      %1005 = vmin.xlane.f32.xlu0 %v1004
      %v1006 = vpop.xlane.xlu0 %1005
      %vm1007 = vcmp.eq.f32.partialorder %v1004, %v1006
      %v1008 = vsel %vm1007, %v1003, inf
      %1009 = vmin.xlane.f32.xlu0 %v1008
      %v1010 = vpop.xlane.xlu0 %1009
      %v1011 = vcvt.f32.s32 %v1010
      %v1012 = vcvt.f32.s32 %v1006
      %v1013 = vshll.u32 %v1012, 16
      %v1014 = vadd.s32 %v1013, %v1011
      %v1015 = vsel %vm754, %v831, 2147483647
      %v1016 = vand.u32 %v1015, 65535
      %v1017 = vshra.s32 %v1015, 16
      %v1018 = vcvt.s32.f32 %v1016
      %v1019 = vcvt.s32.f32 %v1017
      %1020 = vmin.xlane.f32.xlu0 %v1019
      %v1021 = vpop.xlane.xlu0 %1020
      %vm1022 = vcmp.eq.f32.partialorder %v1019, %v1021
      %v1023 = vsel %vm1022, %v1018, inf
      %1024 = vmin.xlane.f32.xlu0 %v1023
      %v1025 = vpop.xlane.xlu0 %1024
      %v1026 = vcvt.f32.s32 %v1025
      %v1027 = vcvt.f32.s32 %v1021
      %v1028 = vshll.u32 %v1027, 16
      %v1029 = vadd.s32 %v1028, %v1026
      %v1030 = vsel %vm754, %v832, 2147483647
      %v1031 = vand.u32 %v1030, 65535
      %v1032 = vshra.s32 %v1030, 16
      %v1033 = vcvt.s32.f32 %v1031
      %v1034 = vcvt.s32.f32 %v1032
      %1035 = vmin.xlane.f32.xlu0 %v1034
      %v1036 = vpop.xlane.xlu0 %1035
      %vm1037 = vcmp.eq.f32.partialorder %v1034, %v1036
      %v1038 = vsel %vm1037, %v1033, inf
      %1039 = vmin.xlane.f32.xlu0 %v1038
      %v1040 = vpop.xlane.xlu0 %1039
      %v1041 = vcvt.f32.s32 %v1040
      %v1042 = vcvt.f32.s32 %v1036
      %v1043 = vshll.u32 %v1042, 16
      %v1044 = vadd.s32 %v1043, %v1041
      %v1045 = vsel %vm754, %v833, 2147483647
      %v1046 = vand.u32 %v1045, 65535
      %v1047 = vshra.s32 %v1045, 16
      %v1048 = vcvt.s32.f32 %v1046
      %v1049 = vcvt.s32.f32 %v1047
      %1050 = vmin.xlane.f32.xlu0 %v1049
      %v1051 = vpop.xlane.xlu0 %1050
      %vm1052 = vcmp.eq.f32.partialorder %v1049, %v1051
      %v1053 = vsel %vm1052, %v1048, inf
      %1054 = vmin.xlane.f32.xlu0 %v1053
      %v1055 = vpop.xlane.xlu0 %1054
      %v1056 = vcvt.f32.s32 %v1055
      %v1057 = vcvt.f32.s32 %v1051
      %v1058 = vshll.u32 %v1057, 16
      %v1059 = vadd.s32 %v1058, %v1056
      %v1060 = vsel %vm754, %v834, 2147483647
      %v1061 = vand.u32 %v1060, 65535
      %v1062 = vshra.s32 %v1060, 16
      %v1063 = vcvt.s32.f32 %v1061
      %v1064 = vcvt.s32.f32 %v1062
      %1065 = vmin.xlane.f32.xlu0 %v1064
      %v1066 = vpop.xlane.xlu0 %1065
      %vm1067 = vcmp.eq.f32.partialorder %v1064, %v1066
      %v1068 = vsel %vm1067, %v1063, inf
      %1069 = vmin.xlane.f32.xlu0 %v1068
      %v1070 = vpop.xlane.xlu0 %1069
      %v1071 = vcvt.f32.s32 %v1070
      %v1072 = vcvt.f32.s32 %v1066
      %v1073 = vshll.u32 %v1072, 16
      %v1074 = vadd.s32 %v1073, %v1071
      %vm1075 = vcmp.eq.s32.totalorder %v753, %v849
      %vm1076 = vcmp.eq.s32.totalorder %v753, %v864
      %vm1077 = vcmp.eq.s32.totalorder %v753, %v879
      %vm1078 = vcmp.eq.s32.totalorder %v753, %v894
      %vm1079 = vcmp.eq.s32.totalorder %v753, %v909
      %vm1080 = vcmp.eq.s32.totalorder %v753, %v924
      %vm1081 = vcmp.eq.s32.totalorder %v753, %v939
      %vm1082 = vcmp.eq.s32.totalorder %v753, %v954
      %vm1083 = vcmp.eq.s32.totalorder %v753, %v969
      %vm1084 = vcmp.eq.s32.totalorder %v753, %v984
      %vm1085 = vcmp.eq.s32.totalorder %v753, %v999
      %vm1086 = vcmp.eq.s32.totalorder %v753, %v1014
      %vm1087 = vcmp.eq.s32.totalorder %v753, %v1029
      %vm1088 = vcmp.eq.s32.totalorder %v753, %v1044
      %vm1089 = vcmp.eq.s32.totalorder %v753, %v1059
      %vm1090 = vcmp.eq.s32.totalorder %v753, %v1074
      %v1091 = vsel %vm1075, 1e+10, %v736
      %v1092 = vsel %vm1076, 1e+10, %v737
      %v1093 = vsel %vm1077, 1e+10, %v738
      %v1094 = vsel %vm1078, 1e+10, %v739
      %v1095 = vsel %vm1079, 1e+10, %v740
      %v1096 = vsel %vm1080, 1e+10, %v741
      %v1097 = vsel %vm1081, 1e+10, %v742
      %v1098 = vsel %vm1082, 1e+10, %v743
      %v1099 = vsel %vm1083, 1e+10, %v744
      %v1100 = vsel %vm1084, 1e+10, %v745
      %v1101 = vsel %vm1085, 1e+10, %v746
      %v1102 = vsel %vm1086, 1e+10, %v747
      %v1103 = vsel %vm1087, 1e+10, %v748
      %v1104 = vsel %vm1088, 1e+10, %v749
      %v1105 = vsel %vm1089, 1e+10, %v750
      %v1106 = vsel %vm1090, 1e+10, %v751
      %v1107 = vrsqrt.pop %v757
      %v1108 = vmul.f32 %v757, %v1107
      %vm1109 = vcmp.eq.f32.partialorder %v757, inf
      %v1110 = vsel %vm1109, %v757, %v1108
      %vm1111 = vcmp.eq.f32.partialorder %v757, 0.0
      %v1112 = vand.u32 %v757, 2147483648
      %v1113 = vsel %vm1111, %v1112, %v1110
      %v1114 = vrsqrt.pop %v760
      %v1115 = vmul.f32 %v760, %v1114
      %vm1116 = vcmp.eq.f32.partialorder %v760, inf
      %v1117 = vsel %vm1116, %v760, %v1115
      %vm1118 = vcmp.eq.f32.partialorder %v760, 0.0
      %v1119 = vand.u32 %v760, 2147483648
      %v1120 = vsel %vm1118, %v1119, %v1117
      %v1121 = vrsqrt.pop %v763
      %v1122 = vmul.f32 %v763, %v1121
      %vm1123 = vcmp.eq.f32.partialorder %v763, inf
      %v1124 = vsel %vm1123, %v763, %v1122
      %vm1125 = vcmp.eq.f32.partialorder %v763, 0.0
      %v1126 = vand.u32 %v763, 2147483648
      %v1127 = vsel %vm1125, %v1126, %v1124
      %v1128 = vrsqrt.pop %v766
      %v1129 = vmul.f32 %v766, %v1128
      %vm1130 = vcmp.eq.f32.partialorder %v766, inf
      %v1131 = vsel %vm1130, %v766, %v1129
      %vm1132 = vcmp.eq.f32.partialorder %v766, 0.0
      %v1133 = vand.u32 %v766, 2147483648
      %v1134 = vsel %vm1132, %v1133, %v1131
      %v1135 = vrsqrt.pop %v769
      %v1136 = vmul.f32 %v769, %v1135
      %vm1137 = vcmp.eq.f32.partialorder %v769, inf
      %v1138 = vsel %vm1137, %v769, %v1136
      %vm1139 = vcmp.eq.f32.partialorder %v769, 0.0
      %v1140 = vand.u32 %v769, 2147483648
      %v1141 = vsel %vm1139, %v1140, %v1138
      %v1142 = vrsqrt.pop %v772
      %v1143 = vmul.f32 %v772, %v1142
      %vm1144 = vcmp.eq.f32.partialorder %v772, inf
      %v1145 = vsel %vm1144, %v772, %v1143
      %vm1146 = vcmp.eq.f32.partialorder %v772, 0.0
      %v1147 = vand.u32 %v772, 2147483648
      %v1148 = vsel %vm1146, %v1147, %v1145
      %v1149 = vrsqrt.pop %v775
      %v1150 = vmul.f32 %v775, %v1149
      %vm1151 = vcmp.eq.f32.partialorder %v775, inf
      %v1152 = vsel %vm1151, %v775, %v1150
      %vm1153 = vcmp.eq.f32.partialorder %v775, 0.0
      %v1154 = vand.u32 %v775, 2147483648
      %v1155 = vsel %vm1153, %v1154, %v1152
      %v1156 = vrsqrt.pop %v778
      %v1157 = vmul.f32 %v778, %v1156
      %vm1158 = vcmp.eq.f32.partialorder %v778, inf
      %v1159 = vsel %vm1158, %v778, %v1157
      %vm1160 = vcmp.eq.f32.partialorder %v778, 0.0
      %v1161 = vand.u32 %v778, 2147483648
      %v1162 = vsel %vm1160, %v1161, %v1159
      %v1163 = vrsqrt.pop %v781
      %v1164 = vmul.f32 %v781, %v1163
      %vm1165 = vcmp.eq.f32.partialorder %v781, inf
      %v1166 = vsel %vm1165, %v781, %v1164
      %vm1167 = vcmp.eq.f32.partialorder %v781, 0.0
      %v1168 = vand.u32 %v781, 2147483648
      %v1169 = vsel %vm1167, %v1168, %v1166
      %v1170 = vrsqrt.pop %v784
      %v1171 = vmul.f32 %v784, %v1170
      %vm1172 = vcmp.eq.f32.partialorder %v784, inf
      %v1173 = vsel %vm1172, %v784, %v1171
      %vm1174 = vcmp.eq.f32.partialorder %v784, 0.0
      %v1175 = vand.u32 %v784, 2147483648
      %v1176 = vsel %vm1174, %v1175, %v1173
      %v1177 = vrsqrt.pop %v787
      %v1178 = vmul.f32 %v787, %v1177
      %vm1179 = vcmp.eq.f32.partialorder %v787, inf
      %v1180 = vsel %vm1179, %v787, %v1178
      %vm1181 = vcmp.eq.f32.partialorder %v787, 0.0
      %v1182 = vand.u32 %v787, 2147483648
      %v1183 = vsel %vm1181, %v1182, %v1180
      %v1184 = vrsqrt.pop %v790
      %v1185 = vmul.f32 %v790, %v1184
      %vm1186 = vcmp.eq.f32.partialorder %v790, inf
      %v1187 = vsel %vm1186, %v790, %v1185
      %vm1188 = vcmp.eq.f32.partialorder %v790, 0.0
      %v1189 = vand.u32 %v790, 2147483648
      %v1190 = vsel %vm1188, %v1189, %v1187
      %v1191 = vrsqrt.pop %v793
      %v1192 = vmul.f32 %v793, %v1191
      %vm1193 = vcmp.eq.f32.partialorder %v793, inf
      %v1194 = vsel %vm1193, %v793, %v1192
      %vm1195 = vcmp.eq.f32.partialorder %v793, 0.0
      %v1196 = vand.u32 %v793, 2147483648
      %v1197 = vsel %vm1195, %v1196, %v1194
      %v1198 = vrsqrt.pop %v796
      %v1199 = vmul.f32 %v796, %v1198
      %vm1200 = vcmp.eq.f32.partialorder %v796, inf
      %v1201 = vsel %vm1200, %v796, %v1199
      %vm1202 = vcmp.eq.f32.partialorder %v796, 0.0
      %v1203 = vand.u32 %v796, 2147483648
      %v1204 = vsel %vm1202, %v1203, %v1201
      %v1205 = vrsqrt.pop %v799
      %v1206 = vmul.f32 %v799, %v1205
      %vm1207 = vcmp.eq.f32.partialorder %v799, inf
      %v1208 = vsel %vm1207, %v799, %v1206
      %vm1209 = vcmp.eq.f32.partialorder %v799, 0.0
      %v1210 = vand.u32 %v799, 2147483648
      %v1211 = vsel %vm1209, %v1210, %v1208
      %v1212 = vrsqrt.pop %v802
      %v1213 = vmul.f32 %v802, %v1212
      %vm1214 = vcmp.eq.f32.partialorder %v802, inf
      %v1215 = vsel %vm1214, %v802, %v1213
      %vm1216 = vcmp.eq.f32.partialorder %v802, 0.0
      %v1217 = vand.u32 %v802, 2147483648
      %v1218 = vsel %vm1216, %v1217, %v1215
      %v1219 = vadd.f32 %v1113, 1e-08
      %v1220 = vadd.f32 %v1120, 1e-08
      %v1221 = vadd.f32 %v1127, 1e-08
      %v1222 = vadd.f32 %v1134, 1e-08
      %v1223 = vadd.f32 %v1141, 1e-08
      %v1224 = vadd.f32 %v1148, 1e-08
      %v1225 = vadd.f32 %v1155, 1e-08
      %v1226 = vadd.f32 %v1162, 1e-08
      %v1227 = vadd.f32 %v1169, 1e-08
      %v1228 = vadd.f32 %v1176, 1e-08
      %v1229 = vadd.f32 %v1183, 1e-08
      %v1230 = vadd.f32 %v1190, 1e-08
      %v1231 = vadd.f32 %v1197, 1e-08
      %v1232 = vadd.f32 %v1204, 1e-08
      %v1233 = vadd.f32 %v1211, 1e-08
      %v1234 = vadd.f32 %v1218, 1e-08
      %v1235 = vrcp.pop %v1219
      %v1236 = vrcp.pop %v1220
      %v1237 = vrcp.pop %v1221
      %v1238 = vrcp.pop %v1222
      %v1239 = vrcp.pop %v1223
      %v1240 = vrcp.pop %v1224
      %v1241 = vrcp.pop %v1225
      %v1242 = vrcp.pop %v1226
      %v1243 = vrcp.pop %v1227
      %v1244 = vrcp.pop %v1228
      %v1245 = vrcp.pop %v1229
      %v1246 = vrcp.pop %v1230
      %v1247 = vrcp.pop %v1231
      %v1248 = vrcp.pop %v1232
      %v1249 = vrcp.pop %v1233
      %v1250 = vrcp.pop %v1234
      %v1251 = vsel %vm754, %v1091, inf
      %1252 = vmin.xlane.f32.xlu0 %v1251
      %v1253 = vpop.xlane.xlu0 %1252
      %v1254 = vsel %vm754, %v1092, inf
      %1255 = vmin.xlane.f32.xlu0 %v1254
      %v1256 = vpop.xlane.xlu0 %1255
      %v1257 = vsel %vm754, %v1093, inf
      %1258 = vmin.xlane.f32.xlu0 %v1257
      %v1259 = vpop.xlane.xlu0 %1258
      %v1260 = vsel %vm754, %v1094, inf
      %1261 = vmin.xlane.f32.xlu0 %v1260
      %v1262 = vpop.xlane.xlu0 %1261
      %v1263 = vsel %vm754, %v1095, inf
      %1264 = vmin.xlane.f32.xlu0 %v1263
      %v1265 = vpop.xlane.xlu0 %1264
      %v1266 = vsel %vm754, %v1096, inf
      %1267 = vmin.xlane.f32.xlu0 %v1266
      %v1268 = vpop.xlane.xlu0 %1267
      %v1269 = vsel %vm754, %v1097, inf
      %1270 = vmin.xlane.f32.xlu0 %v1269
      %v1271 = vpop.xlane.xlu0 %1270
      %v1272 = vsel %vm754, %v1098, inf
      %1273 = vmin.xlane.f32.xlu0 %v1272
      %v1274 = vpop.xlane.xlu0 %1273
      %v1275 = vsel %vm754, %v1099, inf
      %1276 = vmin.xlane.f32.xlu0 %v1275
      %v1277 = vpop.xlane.xlu0 %1276
      %v1278 = vsel %vm754, %v1100, inf
      %1279 = vmin.xlane.f32.xlu0 %v1278
      %v1280 = vpop.xlane.xlu0 %1279
      %v1281 = vsel %vm754, %v1101, inf
      %1282 = vmin.xlane.f32.xlu0 %v1281
      %v1283 = vpop.xlane.xlu0 %1282
      %v1284 = vsel %vm754, %v1102, inf
      %1285 = vmin.xlane.f32.xlu0 %v1284
      %v1286 = vpop.xlane.xlu0 %1285
      %v1287 = vsel %vm754, %v1103, inf
      %1288 = vmin.xlane.f32.xlu0 %v1287
      %v1289 = vpop.xlane.xlu0 %1288
      %v1290 = vsel %vm754, %v1104, inf
      %1291 = vmin.xlane.f32.xlu0 %v1290
      %v1292 = vpop.xlane.xlu0 %1291
      %v1293 = vsel %vm754, %v1105, inf
      %1294 = vmin.xlane.f32.xlu0 %v1293
      %v1295 = vpop.xlane.xlu0 %1294
      %v1296 = vsel %vm754, %v1106, inf
      %1297 = vmin.xlane.f32.xlu0 %v1296
      %v1298 = vpop.xlane.xlu0 %1297
      %vm1299 = vcmp.eq.f32.partialorder %v1091, %v1253
      %vm1300 = vcmp.eq.f32.partialorder %v1092, %v1256
      %vm1301 = vcmp.eq.f32.partialorder %v1093, %v1259
      %vm1302 = vcmp.eq.f32.partialorder %v1094, %v1262
      %vm1303 = vcmp.eq.f32.partialorder %v1095, %v1265
      %vm1304 = vcmp.eq.f32.partialorder %v1096, %v1268
      %vm1305 = vcmp.eq.f32.partialorder %v1097, %v1271
      %vm1306 = vcmp.eq.f32.partialorder %v1098, %v1274
      %vm1307 = vcmp.eq.f32.partialorder %v1099, %v1277
      %vm1308 = vcmp.eq.f32.partialorder %v1100, %v1280
      %vm1309 = vcmp.eq.f32.partialorder %v1101, %v1283
      %vm1310 = vcmp.eq.f32.partialorder %v1102, %v1286
      %vm1311 = vcmp.eq.f32.partialorder %v1103, %v1289
      %vm1312 = vcmp.eq.f32.partialorder %v1104, %v1292
      %vm1313 = vcmp.eq.f32.partialorder %v1105, %v1295
      %vm1314 = vcmp.eq.f32.partialorder %v1106, %v1298
      %v1315 = vsel %vm1299, %v753, 64
      %v1316 = vsel %vm1300, %v753, 64
      %v1317 = vsel %vm1301, %v753, 64
      %v1318 = vsel %vm1302, %v753, 64
      %v1319 = vsel %vm1303, %v753, 64
      %v1320 = vsel %vm1304, %v753, 64
      %v1321 = vsel %vm1305, %v753, 64
      %v1322 = vsel %vm1306, %v753, 64
      %v1323 = vsel %vm1307, %v753, 64
      %v1324 = vsel %vm1308, %v753, 64
      %v1325 = vsel %vm1309, %v753, 64
      %v1326 = vsel %vm1310, %v753, 64
      %v1327 = vsel %vm1311, %v753, 64
      %v1328 = vsel %vm1312, %v753, 64
      %v1329 = vsel %vm1313, %v753, 64
      %v1330 = vsel %vm1314, %v753, 64
      %v1331 = vsel %vm754, %v1315, 2147483647
      %v1332 = vand.u32 %v1331, 65535
      %v1333 = vshra.s32 %v1331, 16
      %v1334 = vcvt.s32.f32 %v1332
      %v1335 = vcvt.s32.f32 %v1333
      %1336 = vmin.xlane.f32.xlu0 %v1335
      %v1337 = vpop.xlane.xlu0 %1336
      %vm1338 = vcmp.eq.f32.partialorder %v1335, %v1337
      %v1339 = vsel %vm1338, %v1334, inf
      %1340 = vmin.xlane.f32.xlu0 %v1339
      %v1341 = vpop.xlane.xlu0 %1340
      %v1342 = vcvt.f32.s32 %v1341
      %v1343 = vcvt.f32.s32 %v1337
      %v1344 = vshll.u32 %v1343, 16
      %v1345 = vadd.s32 %v1344, %v1342
      %v1346 = vsel %vm754, %v1316, 2147483647
      %v1347 = vand.u32 %v1346, 65535
      %v1348 = vshra.s32 %v1346, 16
      %v1349 = vcvt.s32.f32 %v1347
      %v1350 = vcvt.s32.f32 %v1348
      %1351 = vmin.xlane.f32.xlu0 %v1350
      %v1352 = vpop.xlane.xlu0 %1351
      %vm1353 = vcmp.eq.f32.partialorder %v1350, %v1352
      %v1354 = vsel %vm1353, %v1349, inf
      %1355 = vmin.xlane.f32.xlu0 %v1354
      %v1356 = vpop.xlane.xlu0 %1355
      %v1357 = vcvt.f32.s32 %v1356
      %v1358 = vcvt.f32.s32 %v1352
      %v1359 = vshll.u32 %v1358, 16
      %v1360 = vadd.s32 %v1359, %v1357
      %v1361 = vsel %vm754, %v1317, 2147483647
      %v1362 = vand.u32 %v1361, 65535
      %v1363 = vshra.s32 %v1361, 16
      %v1364 = vcvt.s32.f32 %v1362
      %v1365 = vcvt.s32.f32 %v1363
      %1366 = vmin.xlane.f32.xlu0 %v1365
      %v1367 = vpop.xlane.xlu0 %1366
      %vm1368 = vcmp.eq.f32.partialorder %v1365, %v1367
      %v1369 = vsel %vm1368, %v1364, inf
      %1370 = vmin.xlane.f32.xlu0 %v1369
      %v1371 = vpop.xlane.xlu0 %1370
      %v1372 = vcvt.f32.s32 %v1371
      %v1373 = vcvt.f32.s32 %v1367
      %v1374 = vshll.u32 %v1373, 16
      %v1375 = vadd.s32 %v1374, %v1372
      %v1376 = vsel %vm754, %v1318, 2147483647
      %v1377 = vand.u32 %v1376, 65535
      %v1378 = vshra.s32 %v1376, 16
      %v1379 = vcvt.s32.f32 %v1377
      %v1380 = vcvt.s32.f32 %v1378
      %1381 = vmin.xlane.f32.xlu0 %v1380
      %v1382 = vpop.xlane.xlu0 %1381
      %vm1383 = vcmp.eq.f32.partialorder %v1380, %v1382
      %v1384 = vsel %vm1383, %v1379, inf
      %1385 = vmin.xlane.f32.xlu0 %v1384
      %v1386 = vpop.xlane.xlu0 %1385
      %v1387 = vcvt.f32.s32 %v1386
      %v1388 = vcvt.f32.s32 %v1382
      %v1389 = vshll.u32 %v1388, 16
      %v1390 = vadd.s32 %v1389, %v1387
      %v1391 = vsel %vm754, %v1319, 2147483647
      %v1392 = vand.u32 %v1391, 65535
      %v1393 = vshra.s32 %v1391, 16
      %v1394 = vcvt.s32.f32 %v1392
      %v1395 = vcvt.s32.f32 %v1393
      %1396 = vmin.xlane.f32.xlu0 %v1395
      %v1397 = vpop.xlane.xlu0 %1396
      %vm1398 = vcmp.eq.f32.partialorder %v1395, %v1397
      %v1399 = vsel %vm1398, %v1394, inf
      %1400 = vmin.xlane.f32.xlu0 %v1399
      %v1401 = vpop.xlane.xlu0 %1400
      %v1402 = vcvt.f32.s32 %v1401
      %v1403 = vcvt.f32.s32 %v1397
      %v1404 = vshll.u32 %v1403, 16
      %v1405 = vadd.s32 %v1404, %v1402
      %v1406 = vsel %vm754, %v1320, 2147483647
      %v1407 = vand.u32 %v1406, 65535
      %v1408 = vshra.s32 %v1406, 16
      %v1409 = vcvt.s32.f32 %v1407
      %v1410 = vcvt.s32.f32 %v1408
      %1411 = vmin.xlane.f32.xlu0 %v1410
      %v1412 = vpop.xlane.xlu0 %1411
      %vm1413 = vcmp.eq.f32.partialorder %v1410, %v1412
      %v1414 = vsel %vm1413, %v1409, inf
      %1415 = vmin.xlane.f32.xlu0 %v1414
      %v1416 = vpop.xlane.xlu0 %1415
      %v1417 = vcvt.f32.s32 %v1416
      %v1418 = vcvt.f32.s32 %v1412
      %v1419 = vshll.u32 %v1418, 16
      %v1420 = vadd.s32 %v1419, %v1417
      %v1421 = vsel %vm754, %v1321, 2147483647
      %v1422 = vand.u32 %v1421, 65535
      %v1423 = vshra.s32 %v1421, 16
      %v1424 = vcvt.s32.f32 %v1422
      %v1425 = vcvt.s32.f32 %v1423
      %1426 = vmin.xlane.f32.xlu0 %v1425
      %v1427 = vpop.xlane.xlu0 %1426
      %vm1428 = vcmp.eq.f32.partialorder %v1425, %v1427
      %v1429 = vsel %vm1428, %v1424, inf
      %1430 = vmin.xlane.f32.xlu0 %v1429
      %v1431 = vpop.xlane.xlu0 %1430
      %v1432 = vcvt.f32.s32 %v1431
      %v1433 = vcvt.f32.s32 %v1427
      %v1434 = vshll.u32 %v1433, 16
      %v1435 = vadd.s32 %v1434, %v1432
      %v1436 = vsel %vm754, %v1322, 2147483647
      %v1437 = vand.u32 %v1436, 65535
      %v1438 = vshra.s32 %v1436, 16
      %v1439 = vcvt.s32.f32 %v1437
      %v1440 = vcvt.s32.f32 %v1438
      %1441 = vmin.xlane.f32.xlu0 %v1440
      %v1442 = vpop.xlane.xlu0 %1441
      %vm1443 = vcmp.eq.f32.partialorder %v1440, %v1442
      %v1444 = vsel %vm1443, %v1439, inf
      %1445 = vmin.xlane.f32.xlu0 %v1444
      %v1446 = vpop.xlane.xlu0 %1445
      %v1447 = vcvt.f32.s32 %v1446
      %v1448 = vcvt.f32.s32 %v1442
      %v1449 = vshll.u32 %v1448, 16
      %v1450 = vadd.s32 %v1449, %v1447
      %v1451 = vsel %vm754, %v1323, 2147483647
      %v1452 = vand.u32 %v1451, 65535
      %v1453 = vshra.s32 %v1451, 16
      %v1454 = vcvt.s32.f32 %v1452
      %v1455 = vcvt.s32.f32 %v1453
      %1456 = vmin.xlane.f32.xlu0 %v1455
      %v1457 = vpop.xlane.xlu0 %1456
      %vm1458 = vcmp.eq.f32.partialorder %v1455, %v1457
      %v1459 = vsel %vm1458, %v1454, inf
      %1460 = vmin.xlane.f32.xlu0 %v1459
      %v1461 = vpop.xlane.xlu0 %1460
      %v1462 = vcvt.f32.s32 %v1461
      %v1463 = vcvt.f32.s32 %v1457
      %v1464 = vshll.u32 %v1463, 16
      %v1465 = vadd.s32 %v1464, %v1462
      %v1466 = vsel %vm754, %v1324, 2147483647
      %v1467 = vand.u32 %v1466, 65535
      %v1468 = vshra.s32 %v1466, 16
      %v1469 = vcvt.s32.f32 %v1467
      %v1470 = vcvt.s32.f32 %v1468
      %1471 = vmin.xlane.f32.xlu0 %v1470
      %v1472 = vpop.xlane.xlu0 %1471
      %vm1473 = vcmp.eq.f32.partialorder %v1470, %v1472
      %v1474 = vsel %vm1473, %v1469, inf
      %1475 = vmin.xlane.f32.xlu0 %v1474
      %v1476 = vpop.xlane.xlu0 %1475
      %v1477 = vcvt.f32.s32 %v1476
      %v1478 = vcvt.f32.s32 %v1472
      %v1479 = vshll.u32 %v1478, 16
      %v1480 = vadd.s32 %v1479, %v1477
      %v1481 = vsel %vm754, %v1325, 2147483647
      %v1482 = vand.u32 %v1481, 65535
      %v1483 = vshra.s32 %v1481, 16
      %v1484 = vcvt.s32.f32 %v1482
      %v1485 = vcvt.s32.f32 %v1483
      %1486 = vmin.xlane.f32.xlu0 %v1485
      %v1487 = vpop.xlane.xlu0 %1486
      %vm1488 = vcmp.eq.f32.partialorder %v1485, %v1487
      %v1489 = vsel %vm1488, %v1484, inf
      %1490 = vmin.xlane.f32.xlu0 %v1489
      %v1491 = vpop.xlane.xlu0 %1490
      %v1492 = vcvt.f32.s32 %v1491
      %v1493 = vcvt.f32.s32 %v1487
      %v1494 = vshll.u32 %v1493, 16
      %v1495 = vadd.s32 %v1494, %v1492
      %v1496 = vsel %vm754, %v1326, 2147483647
      %v1497 = vand.u32 %v1496, 65535
      %v1498 = vshra.s32 %v1496, 16
      %v1499 = vcvt.s32.f32 %v1497
      %v1500 = vcvt.s32.f32 %v1498
      %1501 = vmin.xlane.f32.xlu0 %v1500
      %v1502 = vpop.xlane.xlu0 %1501
      %vm1503 = vcmp.eq.f32.partialorder %v1500, %v1502
      %v1504 = vsel %vm1503, %v1499, inf
      %1505 = vmin.xlane.f32.xlu0 %v1504
      %v1506 = vpop.xlane.xlu0 %1505
      %v1507 = vcvt.f32.s32 %v1506
      %v1508 = vcvt.f32.s32 %v1502
      %v1509 = vshll.u32 %v1508, 16
      %v1510 = vadd.s32 %v1509, %v1507
      %v1511 = vsel %vm754, %v1327, 2147483647
      %v1512 = vand.u32 %v1511, 65535
      %v1513 = vshra.s32 %v1511, 16
      %v1514 = vcvt.s32.f32 %v1512
      %v1515 = vcvt.s32.f32 %v1513
      %1516 = vmin.xlane.f32.xlu0 %v1515
      %v1517 = vpop.xlane.xlu0 %1516
      %vm1518 = vcmp.eq.f32.partialorder %v1515, %v1517
      %v1519 = vsel %vm1518, %v1514, inf
      %1520 = vmin.xlane.f32.xlu0 %v1519
      %v1521 = vpop.xlane.xlu0 %1520
      %v1522 = vcvt.f32.s32 %v1521
      %v1523 = vcvt.f32.s32 %v1517
      %v1524 = vshll.u32 %v1523, 16
      %v1525 = vadd.s32 %v1524, %v1522
      %v1526 = vsel %vm754, %v1328, 2147483647
      %v1527 = vand.u32 %v1526, 65535
      %v1528 = vshra.s32 %v1526, 16
      %v1529 = vcvt.s32.f32 %v1527
      %v1530 = vcvt.s32.f32 %v1528
      %1531 = vmin.xlane.f32.xlu0 %v1530
      %v1532 = vpop.xlane.xlu0 %1531
      %vm1533 = vcmp.eq.f32.partialorder %v1530, %v1532
      %v1534 = vsel %vm1533, %v1529, inf
      %1535 = vmin.xlane.f32.xlu0 %v1534
      %v1536 = vpop.xlane.xlu0 %1535
      %v1537 = vcvt.f32.s32 %v1536
      %v1538 = vcvt.f32.s32 %v1532
      %v1539 = vshll.u32 %v1538, 16
      %v1540 = vadd.s32 %v1539, %v1537
      %v1541 = vsel %vm754, %v1329, 2147483647
      %v1542 = vand.u32 %v1541, 65535
      %v1543 = vshra.s32 %v1541, 16
      %v1544 = vcvt.s32.f32 %v1542
      %v1545 = vcvt.s32.f32 %v1543
      %1546 = vmin.xlane.f32.xlu0 %v1545
      %v1547 = vpop.xlane.xlu0 %1546
      %vm1548 = vcmp.eq.f32.partialorder %v1545, %v1547
      %v1549 = vsel %vm1548, %v1544, inf
      %1550 = vmin.xlane.f32.xlu0 %v1549
      %v1551 = vpop.xlane.xlu0 %1550
      %v1552 = vcvt.f32.s32 %v1551
      %v1553 = vcvt.f32.s32 %v1547
      %v1554 = vshll.u32 %v1553, 16
      %v1555 = vadd.s32 %v1554, %v1552
      %v1556 = vsel %vm754, %v1330, 2147483647
      %v1557 = vand.u32 %v1556, 65535
      %v1558 = vshra.s32 %v1556, 16
      %v1559 = vcvt.s32.f32 %v1557
      %v1560 = vcvt.s32.f32 %v1558
      %1561 = vmin.xlane.f32.xlu0 %v1560
      %v1562 = vpop.xlane.xlu0 %1561
      %vm1563 = vcmp.eq.f32.partialorder %v1560, %v1562
      %v1564 = vsel %vm1563, %v1559, inf
      %1565 = vmin.xlane.f32.xlu0 %v1564
      %v1566 = vpop.xlane.xlu0 %1565
      %v1567 = vcvt.f32.s32 %v1566
      %v1568 = vcvt.f32.s32 %v1562
      %v1569 = vshll.u32 %v1568, 16
      %v1570 = vadd.s32 %v1569, %v1567
      %vm1571 = vcmp.eq.s32.totalorder %v753, %v1345
      %vm1572 = vcmp.eq.s32.totalorder %v753, %v1360
      %vm1573 = vcmp.eq.s32.totalorder %v753, %v1375
      %vm1574 = vcmp.eq.s32.totalorder %v753, %v1390
      %vm1575 = vcmp.eq.s32.totalorder %v753, %v1405
      %vm1576 = vcmp.eq.s32.totalorder %v753, %v1420
      %vm1577 = vcmp.eq.s32.totalorder %v753, %v1435
      %vm1578 = vcmp.eq.s32.totalorder %v753, %v1450
      %vm1579 = vcmp.eq.s32.totalorder %v753, %v1465
      %vm1580 = vcmp.eq.s32.totalorder %v753, %v1480
      %vm1581 = vcmp.eq.s32.totalorder %v753, %v1495
      %vm1582 = vcmp.eq.s32.totalorder %v753, %v1510
      %vm1583 = vcmp.eq.s32.totalorder %v753, %v1525
      %vm1584 = vcmp.eq.s32.totalorder %v753, %v1540
      %vm1585 = vcmp.eq.s32.totalorder %v753, %v1555
      %vm1586 = vcmp.eq.s32.totalorder %v753, %v1570
      %v1587 = vsel %vm1571, 1e+10, %v1091
      %v1588 = vsel %vm1572, 1e+10, %v1092
      %v1589 = vsel %vm1573, 1e+10, %v1093
      %v1590 = vsel %vm1574, 1e+10, %v1094
      %v1591 = vsel %vm1575, 1e+10, %v1095
      %v1592 = vsel %vm1576, 1e+10, %v1096
      %v1593 = vsel %vm1577, 1e+10, %v1097
      %v1594 = vsel %vm1578, 1e+10, %v1098
      %v1595 = vsel %vm1579, 1e+10, %v1099
      %v1596 = vsel %vm1580, 1e+10, %v1100
      %v1597 = vsel %vm1581, 1e+10, %v1101
      %v1598 = vsel %vm1582, 1e+10, %v1102
      %v1599 = vsel %vm1583, 1e+10, %v1103
      %v1600 = vsel %vm1584, 1e+10, %v1104
      %v1601 = vsel %vm1585, 1e+10, %v1105
      %v1602 = vsel %vm1586, 1e+10, %v1106
      %v1603 = vrsqrt.pop %v1253
      %v1604 = vmul.f32 %v1253, %v1603
      %vm1605 = vcmp.eq.f32.partialorder %v1253, inf
      %v1606 = vsel %vm1605, %v1253, %v1604
      %vm1607 = vcmp.eq.f32.partialorder %v1253, 0.0
      %v1608 = vand.u32 %v1253, 2147483648
      %v1609 = vsel %vm1607, %v1608, %v1606
      %v1610 = vrsqrt.pop %v1256
      %v1611 = vmul.f32 %v1256, %v1610
      %vm1612 = vcmp.eq.f32.partialorder %v1256, inf
      %v1613 = vsel %vm1612, %v1256, %v1611
      %vm1614 = vcmp.eq.f32.partialorder %v1256, 0.0
      %v1615 = vand.u32 %v1256, 2147483648
      %v1616 = vsel %vm1614, %v1615, %v1613
      %v1617 = vrsqrt.pop %v1259
      %v1618 = vmul.f32 %v1259, %v1617
      %vm1619 = vcmp.eq.f32.partialorder %v1259, inf
      %v1620 = vsel %vm1619, %v1259, %v1618
      %vm1621 = vcmp.eq.f32.partialorder %v1259, 0.0
      %v1622 = vand.u32 %v1259, 2147483648
      %v1623 = vsel %vm1621, %v1622, %v1620
      %v1624 = vrsqrt.pop %v1262
      %v1625 = vmul.f32 %v1262, %v1624
      %vm1626 = vcmp.eq.f32.partialorder %v1262, inf
      %v1627 = vsel %vm1626, %v1262, %v1625
      %vm1628 = vcmp.eq.f32.partialorder %v1262, 0.0
      %v1629 = vand.u32 %v1262, 2147483648
      %v1630 = vsel %vm1628, %v1629, %v1627
      %v1631 = vrsqrt.pop %v1265
      %v1632 = vmul.f32 %v1265, %v1631
      %vm1633 = vcmp.eq.f32.partialorder %v1265, inf
      %v1634 = vsel %vm1633, %v1265, %v1632
      %vm1635 = vcmp.eq.f32.partialorder %v1265, 0.0
      %v1636 = vand.u32 %v1265, 2147483648
      %v1637 = vsel %vm1635, %v1636, %v1634
      %v1638 = vrsqrt.pop %v1268
      %v1639 = vmul.f32 %v1268, %v1638
      %vm1640 = vcmp.eq.f32.partialorder %v1268, inf
      %v1641 = vsel %vm1640, %v1268, %v1639
      %vm1642 = vcmp.eq.f32.partialorder %v1268, 0.0
      %v1643 = vand.u32 %v1268, 2147483648
      %v1644 = vsel %vm1642, %v1643, %v1641
      %v1645 = vrsqrt.pop %v1271
      %v1646 = vmul.f32 %v1271, %v1645
      %vm1647 = vcmp.eq.f32.partialorder %v1271, inf
      %v1648 = vsel %vm1647, %v1271, %v1646
      %vm1649 = vcmp.eq.f32.partialorder %v1271, 0.0
      %v1650 = vand.u32 %v1271, 2147483648
      %v1651 = vsel %vm1649, %v1650, %v1648
      %v1652 = vrsqrt.pop %v1274
      %v1653 = vmul.f32 %v1274, %v1652
      %vm1654 = vcmp.eq.f32.partialorder %v1274, inf
      %v1655 = vsel %vm1654, %v1274, %v1653
      %vm1656 = vcmp.eq.f32.partialorder %v1274, 0.0
      %v1657 = vand.u32 %v1274, 2147483648
      %v1658 = vsel %vm1656, %v1657, %v1655
      %v1659 = vrsqrt.pop %v1277
      %v1660 = vmul.f32 %v1277, %v1659
      %vm1661 = vcmp.eq.f32.partialorder %v1277, inf
      %v1662 = vsel %vm1661, %v1277, %v1660
      %vm1663 = vcmp.eq.f32.partialorder %v1277, 0.0
      %v1664 = vand.u32 %v1277, 2147483648
      %v1665 = vsel %vm1663, %v1664, %v1662
      %v1666 = vrsqrt.pop %v1280
      %v1667 = vmul.f32 %v1280, %v1666
      %vm1668 = vcmp.eq.f32.partialorder %v1280, inf
      %v1669 = vsel %vm1668, %v1280, %v1667
      %vm1670 = vcmp.eq.f32.partialorder %v1280, 0.0
      %v1671 = vand.u32 %v1280, 2147483648
      %v1672 = vsel %vm1670, %v1671, %v1669
      %v1673 = vrsqrt.pop %v1283
      %v1674 = vmul.f32 %v1283, %v1673
      %vm1675 = vcmp.eq.f32.partialorder %v1283, inf
      %v1676 = vsel %vm1675, %v1283, %v1674
      %vm1677 = vcmp.eq.f32.partialorder %v1283, 0.0
      %v1678 = vand.u32 %v1283, 2147483648
      %v1679 = vsel %vm1677, %v1678, %v1676
      %v1680 = vrsqrt.pop %v1286
      %v1681 = vmul.f32 %v1286, %v1680
      %vm1682 = vcmp.eq.f32.partialorder %v1286, inf
      %v1683 = vsel %vm1682, %v1286, %v1681
      %vm1684 = vcmp.eq.f32.partialorder %v1286, 0.0
      %v1685 = vand.u32 %v1286, 2147483648
      %v1686 = vsel %vm1684, %v1685, %v1683
      %v1687 = vrsqrt.pop %v1289
      %v1688 = vmul.f32 %v1289, %v1687
      %vm1689 = vcmp.eq.f32.partialorder %v1289, inf
      %v1690 = vsel %vm1689, %v1289, %v1688
      %vm1691 = vcmp.eq.f32.partialorder %v1289, 0.0
      %v1692 = vand.u32 %v1289, 2147483648
      %v1693 = vsel %vm1691, %v1692, %v1690
      %v1694 = vrsqrt.pop %v1292
      %v1695 = vmul.f32 %v1292, %v1694
      %vm1696 = vcmp.eq.f32.partialorder %v1292, inf
      %v1697 = vsel %vm1696, %v1292, %v1695
      %vm1698 = vcmp.eq.f32.partialorder %v1292, 0.0
      %v1699 = vand.u32 %v1292, 2147483648
      %v1700 = vsel %vm1698, %v1699, %v1697
      %v1701 = vrsqrt.pop %v1295
      %v1702 = vmul.f32 %v1295, %v1701
      %vm1703 = vcmp.eq.f32.partialorder %v1295, inf
      %v1704 = vsel %vm1703, %v1295, %v1702
      %vm1705 = vcmp.eq.f32.partialorder %v1295, 0.0
      %v1706 = vand.u32 %v1295, 2147483648
      %v1707 = vsel %vm1705, %v1706, %v1704
      %v1708 = vrsqrt.pop %v1298
      %v1709 = vmul.f32 %v1298, %v1708
      %vm1710 = vcmp.eq.f32.partialorder %v1298, inf
      %v1711 = vsel %vm1710, %v1298, %v1709
      %vm1712 = vcmp.eq.f32.partialorder %v1298, 0.0
      %v1713 = vand.u32 %v1298, 2147483648
      %v1714 = vsel %vm1712, %v1713, %v1711
      %v1715 = vadd.f32 %v1609, 1e-08
      %v1716 = vadd.f32 %v1616, 1e-08
      %v1717 = vadd.f32 %v1623, 1e-08
      %v1718 = vadd.f32 %v1630, 1e-08
      %v1719 = vadd.f32 %v1637, 1e-08
      %v1720 = vadd.f32 %v1644, 1e-08
      %v1721 = vadd.f32 %v1651, 1e-08
      %v1722 = vadd.f32 %v1658, 1e-08
      %v1723 = vadd.f32 %v1665, 1e-08
      %v1724 = vadd.f32 %v1672, 1e-08
      %v1725 = vadd.f32 %v1679, 1e-08
      %v1726 = vadd.f32 %v1686, 1e-08
      %v1727 = vadd.f32 %v1693, 1e-08
      %v1728 = vadd.f32 %v1700, 1e-08
      %v1729 = vadd.f32 %v1707, 1e-08
      %v1730 = vadd.f32 %v1714, 1e-08
      %v1731 = vrcp.pop %v1715
      %v1732 = vrcp.pop %v1716
      %v1733 = vrcp.pop %v1717
      %v1734 = vrcp.pop %v1718
      %v1735 = vrcp.pop %v1719
      %v1736 = vrcp.pop %v1720
      %v1737 = vrcp.pop %v1721
      %v1738 = vrcp.pop %v1722
      %v1739 = vrcp.pop %v1723
      %v1740 = vrcp.pop %v1724
      %v1741 = vrcp.pop %v1725
      %v1742 = vrcp.pop %v1726
      %v1743 = vrcp.pop %v1727
      %v1744 = vrcp.pop %v1728
      %v1745 = vrcp.pop %v1729
      %v1746 = vrcp.pop %v1730
      %v1747 = vsel %vm754, %v1587, inf
      %1748 = vmin.xlane.f32.xlu0 %v1747
      %v1749 = vpop.xlane.xlu0 %1748
      %v1750 = vsel %vm754, %v1588, inf
      %1751 = vmin.xlane.f32.xlu0 %v1750
      %v1752 = vpop.xlane.xlu0 %1751
      %v1753 = vsel %vm754, %v1589, inf
      %1754 = vmin.xlane.f32.xlu0 %v1753
      %v1755 = vpop.xlane.xlu0 %1754
      %v1756 = vsel %vm754, %v1590, inf
      %1757 = vmin.xlane.f32.xlu0 %v1756
      %v1758 = vpop.xlane.xlu0 %1757
      %v1759 = vsel %vm754, %v1591, inf
      %1760 = vmin.xlane.f32.xlu0 %v1759
      %v1761 = vpop.xlane.xlu0 %1760
      %v1762 = vsel %vm754, %v1592, inf
      %1763 = vmin.xlane.f32.xlu0 %v1762
      %v1764 = vpop.xlane.xlu0 %1763
      %v1765 = vsel %vm754, %v1593, inf
      %1766 = vmin.xlane.f32.xlu0 %v1765
      %v1767 = vpop.xlane.xlu0 %1766
      %v1768 = vsel %vm754, %v1594, inf
      %1769 = vmin.xlane.f32.xlu0 %v1768
      %v1770 = vpop.xlane.xlu0 %1769
      %v1771 = vsel %vm754, %v1595, inf
      %1772 = vmin.xlane.f32.xlu0 %v1771
      %v1773 = vpop.xlane.xlu0 %1772
      %v1774 = vsel %vm754, %v1596, inf
      %1775 = vmin.xlane.f32.xlu0 %v1774
      %v1776 = vpop.xlane.xlu0 %1775
      %v1777 = vsel %vm754, %v1597, inf
      %1778 = vmin.xlane.f32.xlu0 %v1777
      %v1779 = vpop.xlane.xlu0 %1778
      %v1780 = vsel %vm754, %v1598, inf
      %1781 = vmin.xlane.f32.xlu0 %v1780
      %v1782 = vpop.xlane.xlu0 %1781
      %v1783 = vsel %vm754, %v1599, inf
      %1784 = vmin.xlane.f32.xlu0 %v1783
      %v1785 = vpop.xlane.xlu0 %1784
      %v1786 = vsel %vm754, %v1600, inf
      %1787 = vmin.xlane.f32.xlu0 %v1786
      %v1788 = vpop.xlane.xlu0 %1787
      %v1789 = vsel %vm754, %v1601, inf
      %1790 = vmin.xlane.f32.xlu0 %v1789
      %v1791 = vpop.xlane.xlu0 %1790
      %v1792 = vsel %vm754, %v1602, inf
      %1793 = vmin.xlane.f32.xlu0 %v1792
      %v1794 = vpop.xlane.xlu0 %1793
      %vm1795 = vcmp.eq.f32.partialorder %v1587, %v1749
      %vm1796 = vcmp.eq.f32.partialorder %v1588, %v1752
      %vm1797 = vcmp.eq.f32.partialorder %v1589, %v1755
      %vm1798 = vcmp.eq.f32.partialorder %v1590, %v1758
      %vm1799 = vcmp.eq.f32.partialorder %v1591, %v1761
      %vm1800 = vcmp.eq.f32.partialorder %v1592, %v1764
      %vm1801 = vcmp.eq.f32.partialorder %v1593, %v1767
      %vm1802 = vcmp.eq.f32.partialorder %v1594, %v1770
      %vm1803 = vcmp.eq.f32.partialorder %v1595, %v1773
      %vm1804 = vcmp.eq.f32.partialorder %v1596, %v1776
      %vm1805 = vcmp.eq.f32.partialorder %v1597, %v1779
      %vm1806 = vcmp.eq.f32.partialorder %v1598, %v1782
      %vm1807 = vcmp.eq.f32.partialorder %v1599, %v1785
      %vm1808 = vcmp.eq.f32.partialorder %v1600, %v1788
      %vm1809 = vcmp.eq.f32.partialorder %v1601, %v1791
      %vm1810 = vcmp.eq.f32.partialorder %v1602, %v1794
      %v1811 = vsel %vm1795, %v753, 64
      %v1812 = vsel %vm1796, %v753, 64
      %v1813 = vsel %vm1797, %v753, 64
      %v1814 = vsel %vm1798, %v753, 64
      %v1815 = vsel %vm1799, %v753, 64
      %v1816 = vsel %vm1800, %v753, 64
      %v1817 = vsel %vm1801, %v753, 64
      %v1818 = vsel %vm1802, %v753, 64
      %v1819 = vsel %vm1803, %v753, 64
      %v1820 = vsel %vm1804, %v753, 64
      %v1821 = vsel %vm1805, %v753, 64
      %v1822 = vsel %vm1806, %v753, 64
      %v1823 = vsel %vm1807, %v753, 64
      %v1824 = vsel %vm1808, %v753, 64
      %v1825 = vsel %vm1809, %v753, 64
      %v1826 = vsel %vm1810, %v753, 64
      %v1827 = vsel %vm754, %v1811, 2147483647
      %v1828 = vand.u32 %v1827, 65535
      %v1829 = vshra.s32 %v1827, 16
      %v1830 = vcvt.s32.f32 %v1828
      %v1831 = vcvt.s32.f32 %v1829
      %1832 = vmin.xlane.f32.xlu0 %v1831
      %v1833 = vpop.xlane.xlu0 %1832
      %vm1834 = vcmp.eq.f32.partialorder %v1831, %v1833
      %v1835 = vsel %vm1834, %v1830, inf
      %1836 = vmin.xlane.f32.xlu0 %v1835
      %v1837 = vpop.xlane.xlu0 %1836
      %v1838 = vcvt.f32.s32 %v1837
      %v1839 = vcvt.f32.s32 %v1833
      %v1840 = vshll.u32 %v1839, 16
      %v1841 = vadd.s32 %v1840, %v1838
      %v1842 = vsel %vm754, %v1812, 2147483647
      %v1843 = vand.u32 %v1842, 65535
      %v1844 = vshra.s32 %v1842, 16
      %v1845 = vcvt.s32.f32 %v1843
      %v1846 = vcvt.s32.f32 %v1844
      %1847 = vmin.xlane.f32.xlu0 %v1846
      %v1848 = vpop.xlane.xlu0 %1847
      %vm1849 = vcmp.eq.f32.partialorder %v1846, %v1848
      %v1850 = vsel %vm1849, %v1845, inf
      %1851 = vmin.xlane.f32.xlu0 %v1850
      %v1852 = vpop.xlane.xlu0 %1851
      %v1853 = vcvt.f32.s32 %v1852
      %v1854 = vcvt.f32.s32 %v1848
      %v1855 = vshll.u32 %v1854, 16
      %v1856 = vadd.s32 %v1855, %v1853
      %v1857 = vsel %vm754, %v1813, 2147483647
      %v1858 = vand.u32 %v1857, 65535
      %v1859 = vshra.s32 %v1857, 16
      %v1860 = vcvt.s32.f32 %v1858
      %v1861 = vcvt.s32.f32 %v1859
      %1862 = vmin.xlane.f32.xlu0 %v1861
      %v1863 = vpop.xlane.xlu0 %1862
      %vm1864 = vcmp.eq.f32.partialorder %v1861, %v1863
      %v1865 = vsel %vm1864, %v1860, inf
      %1866 = vmin.xlane.f32.xlu0 %v1865
      %v1867 = vpop.xlane.xlu0 %1866
      %v1868 = vcvt.f32.s32 %v1867
      %v1869 = vcvt.f32.s32 %v1863
      %v1870 = vshll.u32 %v1869, 16
      %v1871 = vadd.s32 %v1870, %v1868
      %v1872 = vsel %vm754, %v1814, 2147483647
      %v1873 = vand.u32 %v1872, 65535
      %v1874 = vshra.s32 %v1872, 16
      %v1875 = vcvt.s32.f32 %v1873
      %v1876 = vcvt.s32.f32 %v1874
      %1877 = vmin.xlane.f32.xlu0 %v1876
      %v1878 = vpop.xlane.xlu0 %1877
      %vm1879 = vcmp.eq.f32.partialorder %v1876, %v1878
      %v1880 = vsel %vm1879, %v1875, inf
      %1881 = vmin.xlane.f32.xlu0 %v1880
      %v1882 = vpop.xlane.xlu0 %1881
      %v1883 = vcvt.f32.s32 %v1882
      %v1884 = vcvt.f32.s32 %v1878
      %v1885 = vshll.u32 %v1884, 16
      %v1886 = vadd.s32 %v1885, %v1883
      %v1887 = vsel %vm754, %v1815, 2147483647
      %v1888 = vand.u32 %v1887, 65535
      %v1889 = vshra.s32 %v1887, 16
      %v1890 = vcvt.s32.f32 %v1888
      %v1891 = vcvt.s32.f32 %v1889
      %1892 = vmin.xlane.f32.xlu0 %v1891
      %v1893 = vpop.xlane.xlu0 %1892
      %vm1894 = vcmp.eq.f32.partialorder %v1891, %v1893
      %v1895 = vsel %vm1894, %v1890, inf
      %1896 = vmin.xlane.f32.xlu0 %v1895
      %v1897 = vpop.xlane.xlu0 %1896
      %v1898 = vcvt.f32.s32 %v1897
      %v1899 = vcvt.f32.s32 %v1893
      %v1900 = vshll.u32 %v1899, 16
      %v1901 = vadd.s32 %v1900, %v1898
      %v1902 = vsel %vm754, %v1816, 2147483647
      %v1903 = vand.u32 %v1902, 65535
      %v1904 = vshra.s32 %v1902, 16
      %v1905 = vcvt.s32.f32 %v1903
      %v1906 = vcvt.s32.f32 %v1904
      %1907 = vmin.xlane.f32.xlu0 %v1906
      %v1908 = vpop.xlane.xlu0 %1907
      %vm1909 = vcmp.eq.f32.partialorder %v1906, %v1908
      %v1910 = vsel %vm1909, %v1905, inf
      %1911 = vmin.xlane.f32.xlu0 %v1910
      %v1912 = vpop.xlane.xlu0 %1911
      %v1913 = vcvt.f32.s32 %v1912
      %v1914 = vcvt.f32.s32 %v1908
      %v1915 = vshll.u32 %v1914, 16
      %v1916 = vadd.s32 %v1915, %v1913
      %v1917 = vsel %vm754, %v1817, 2147483647
      %v1918 = vand.u32 %v1917, 65535
      %v1919 = vshra.s32 %v1917, 16
      %v1920 = vcvt.s32.f32 %v1918
      %v1921 = vcvt.s32.f32 %v1919
      %1922 = vmin.xlane.f32.xlu0 %v1921
      %v1923 = vpop.xlane.xlu0 %1922
      %vm1924 = vcmp.eq.f32.partialorder %v1921, %v1923
      %v1925 = vsel %vm1924, %v1920, inf
      %1926 = vmin.xlane.f32.xlu0 %v1925
      %v1927 = vpop.xlane.xlu0 %1926
      %v1928 = vcvt.f32.s32 %v1927
      %v1929 = vcvt.f32.s32 %v1923
      %v1930 = vshll.u32 %v1929, 16
      %v1931 = vadd.s32 %v1930, %v1928
      %v1932 = vsel %vm754, %v1818, 2147483647
      %v1933 = vand.u32 %v1932, 65535
      %v1934 = vshra.s32 %v1932, 16
      %v1935 = vcvt.s32.f32 %v1933
      %v1936 = vcvt.s32.f32 %v1934
      %1937 = vmin.xlane.f32.xlu0 %v1936
      %v1938 = vpop.xlane.xlu0 %1937
      %vm1939 = vcmp.eq.f32.partialorder %v1936, %v1938
      %v1940 = vsel %vm1939, %v1935, inf
      %1941 = vmin.xlane.f32.xlu0 %v1940
      %v1942 = vpop.xlane.xlu0 %1941
      %v1943 = vcvt.f32.s32 %v1942
      %v1944 = vcvt.f32.s32 %v1938
      %v1945 = vshll.u32 %v1944, 16
      %v1946 = vadd.s32 %v1945, %v1943
      %v1947 = vsel %vm754, %v1819, 2147483647
      %v1948 = vand.u32 %v1947, 65535
      %v1949 = vshra.s32 %v1947, 16
      %v1950 = vcvt.s32.f32 %v1948
      %v1951 = vcvt.s32.f32 %v1949
      %1952 = vmin.xlane.f32.xlu0 %v1951
      %v1953 = vpop.xlane.xlu0 %1952
      %vm1954 = vcmp.eq.f32.partialorder %v1951, %v1953
      %v1955 = vsel %vm1954, %v1950, inf
      %1956 = vmin.xlane.f32.xlu0 %v1955
      %v1957 = vpop.xlane.xlu0 %1956
      %v1958 = vcvt.f32.s32 %v1957
      %v1959 = vcvt.f32.s32 %v1953
      %v1960 = vshll.u32 %v1959, 16
      %v1961 = vadd.s32 %v1960, %v1958
      %v1962 = vsel %vm754, %v1820, 2147483647
      %v1963 = vand.u32 %v1962, 65535
      %v1964 = vshra.s32 %v1962, 16
      %v1965 = vcvt.s32.f32 %v1963
      %v1966 = vcvt.s32.f32 %v1964
      %1967 = vmin.xlane.f32.xlu0 %v1966
      %v1968 = vpop.xlane.xlu0 %1967
      %vm1969 = vcmp.eq.f32.partialorder %v1966, %v1968
      %v1970 = vsel %vm1969, %v1965, inf
      %1971 = vmin.xlane.f32.xlu0 %v1970
      %v1972 = vpop.xlane.xlu0 %1971
      %v1973 = vcvt.f32.s32 %v1972
      %v1974 = vcvt.f32.s32 %v1968
      %v1975 = vshll.u32 %v1974, 16
      %v1976 = vadd.s32 %v1975, %v1973
      %v1977 = vsel %vm754, %v1821, 2147483647
      %v1978 = vand.u32 %v1977, 65535
      %v1979 = vshra.s32 %v1977, 16
      %v1980 = vcvt.s32.f32 %v1978
      %v1981 = vcvt.s32.f32 %v1979
      %1982 = vmin.xlane.f32.xlu0 %v1981
      %v1983 = vpop.xlane.xlu0 %1982
      %vm1984 = vcmp.eq.f32.partialorder %v1981, %v1983
      %v1985 = vsel %vm1984, %v1980, inf
      %1986 = vmin.xlane.f32.xlu0 %v1985
      %v1987 = vpop.xlane.xlu0 %1986
      %v1988 = vcvt.f32.s32 %v1987
      %v1989 = vcvt.f32.s32 %v1983
      %v1990 = vshll.u32 %v1989, 16
      %v1991 = vadd.s32 %v1990, %v1988
      %v1992 = vsel %vm754, %v1822, 2147483647
      %v1993 = vand.u32 %v1992, 65535
      %v1994 = vshra.s32 %v1992, 16
      %v1995 = vcvt.s32.f32 %v1993
      %v1996 = vcvt.s32.f32 %v1994
      %1997 = vmin.xlane.f32.xlu0 %v1996
      %v1998 = vpop.xlane.xlu0 %1997
      %vm1999 = vcmp.eq.f32.partialorder %v1996, %v1998
      %v2000 = vsel %vm1999, %v1995, inf
      %2001 = vmin.xlane.f32.xlu0 %v2000
      %v2002 = vpop.xlane.xlu0 %2001
      %v2003 = vcvt.f32.s32 %v2002
      %v2004 = vcvt.f32.s32 %v1998
      %v2005 = vshll.u32 %v2004, 16
      %v2006 = vadd.s32 %v2005, %v2003
      %v2007 = vsel %vm754, %v1823, 2147483647
      %v2008 = vand.u32 %v2007, 65535
      %v2009 = vshra.s32 %v2007, 16
      %v2010 = vcvt.s32.f32 %v2008
      %v2011 = vcvt.s32.f32 %v2009
      %2012 = vmin.xlane.f32.xlu0 %v2011
      %v2013 = vpop.xlane.xlu0 %2012
      %vm2014 = vcmp.eq.f32.partialorder %v2011, %v2013
      %v2015 = vsel %vm2014, %v2010, inf
      %2016 = vmin.xlane.f32.xlu0 %v2015
      %v2017 = vpop.xlane.xlu0 %2016
      %v2018 = vcvt.f32.s32 %v2017
      %v2019 = vcvt.f32.s32 %v2013
      %v2020 = vshll.u32 %v2019, 16
      %v2021 = vadd.s32 %v2020, %v2018
      %v2022 = vsel %vm754, %v1824, 2147483647
      %v2023 = vand.u32 %v2022, 65535
      %v2024 = vshra.s32 %v2022, 16
      %v2025 = vcvt.s32.f32 %v2023
      %v2026 = vcvt.s32.f32 %v2024
      %2027 = vmin.xlane.f32.xlu0 %v2026
      %v2028 = vpop.xlane.xlu0 %2027
      %vm2029 = vcmp.eq.f32.partialorder %v2026, %v2028
      %v2030 = vsel %vm2029, %v2025, inf
      %2031 = vmin.xlane.f32.xlu0 %v2030
      %v2032 = vpop.xlane.xlu0 %2031
      %v2033 = vcvt.f32.s32 %v2032
      %v2034 = vcvt.f32.s32 %v2028
      %v2035 = vshll.u32 %v2034, 16
      %v2036 = vadd.s32 %v2035, %v2033
      %v2037 = vsel %vm754, %v1825, 2147483647
      %v2038 = vand.u32 %v2037, 65535
      %v2039 = vshra.s32 %v2037, 16
      %v2040 = vcvt.s32.f32 %v2038
      %v2041 = vcvt.s32.f32 %v2039
      %2042 = vmin.xlane.f32.xlu0 %v2041
      %v2043 = vpop.xlane.xlu0 %2042
      %vm2044 = vcmp.eq.f32.partialorder %v2041, %v2043
      %v2045 = vsel %vm2044, %v2040, inf
      %2046 = vmin.xlane.f32.xlu0 %v2045
      %v2047 = vpop.xlane.xlu0 %2046
      %v2048 = vcvt.f32.s32 %v2047
      %v2049 = vcvt.f32.s32 %v2043
      %v2050 = vshll.u32 %v2049, 16
      %v2051 = vadd.s32 %v2050, %v2048
      %v2052 = vsel %vm754, %v1826, 2147483647
      %v2053 = vand.u32 %v2052, 65535
      %v2054 = vshra.s32 %v2052, 16
      %v2055 = vcvt.s32.f32 %v2053
      %v2056 = vcvt.s32.f32 %v2054
      %2057 = vmin.xlane.f32.xlu0 %v2056
      %v2058 = vpop.xlane.xlu0 %2057
      %vm2059 = vcmp.eq.f32.partialorder %v2056, %v2058
      %v2060 = vsel %vm2059, %v2055, inf
      %2061 = vmin.xlane.f32.xlu0 %v2060
      %v2062 = vpop.xlane.xlu0 %2061
      %v2063 = vcvt.f32.s32 %v2062
      %v2064 = vcvt.f32.s32 %v2058
      %v2065 = vshll.u32 %v2064, 16
      %v2066 = vadd.s32 %v2065, %v2063
      %vm2067 = vcmp.eq.s32.totalorder %v753, %v1841
      %vm2068 = vcmp.eq.s32.totalorder %v753, %v1856
      %vm2069 = vcmp.eq.s32.totalorder %v753, %v1871
      %vm2070 = vcmp.eq.s32.totalorder %v753, %v1886
      %vm2071 = vcmp.eq.s32.totalorder %v753, %v1901
      %vm2072 = vcmp.eq.s32.totalorder %v753, %v1916
      %vm2073 = vcmp.eq.s32.totalorder %v753, %v1931
      %vm2074 = vcmp.eq.s32.totalorder %v753, %v1946
      %vm2075 = vcmp.eq.s32.totalorder %v753, %v1961
      %vm2076 = vcmp.eq.s32.totalorder %v753, %v1976
      %vm2077 = vcmp.eq.s32.totalorder %v753, %v1991
      %vm2078 = vcmp.eq.s32.totalorder %v753, %v2006
      %vm2079 = vcmp.eq.s32.totalorder %v753, %v2021
      %vm2080 = vcmp.eq.s32.totalorder %v753, %v2036
      %vm2081 = vcmp.eq.s32.totalorder %v753, %v2051
      %vm2082 = vcmp.eq.s32.totalorder %v753, %v2066
      %v2083 = vrsqrt.pop %v1749
      %v2084 = vmul.f32 %v1749, %v2083
      %vm2085 = vcmp.eq.f32.partialorder %v1749, inf
      %v2086 = vsel %vm2085, %v1749, %v2084
      %vm2087 = vcmp.eq.f32.partialorder %v1749, 0.0
      %v2088 = vand.u32 %v1749, 2147483648
      %v2089 = vsel %vm2087, %v2088, %v2086
      %v2090 = vrsqrt.pop %v1752
      %v2091 = vmul.f32 %v1752, %v2090
      %vm2092 = vcmp.eq.f32.partialorder %v1752, inf
      %v2093 = vsel %vm2092, %v1752, %v2091
      %vm2094 = vcmp.eq.f32.partialorder %v1752, 0.0
      %v2095 = vand.u32 %v1752, 2147483648
      %v2096 = vsel %vm2094, %v2095, %v2093
      %v2097 = vrsqrt.pop %v1755
      %v2098 = vmul.f32 %v1755, %v2097
      %vm2099 = vcmp.eq.f32.partialorder %v1755, inf
      %v2100 = vsel %vm2099, %v1755, %v2098
      %vm2101 = vcmp.eq.f32.partialorder %v1755, 0.0
      %v2102 = vand.u32 %v1755, 2147483648
      %v2103 = vsel %vm2101, %v2102, %v2100
      %v2104 = vrsqrt.pop %v1758
      %v2105 = vmul.f32 %v1758, %v2104
      %vm2106 = vcmp.eq.f32.partialorder %v1758, inf
      %v2107 = vsel %vm2106, %v1758, %v2105
      %vm2108 = vcmp.eq.f32.partialorder %v1758, 0.0
      %v2109 = vand.u32 %v1758, 2147483648
      %v2110 = vsel %vm2108, %v2109, %v2107
      %v2111 = vrsqrt.pop %v1761
      %v2112 = vmul.f32 %v1761, %v2111
      %vm2113 = vcmp.eq.f32.partialorder %v1761, inf
      %v2114 = vsel %vm2113, %v1761, %v2112
      %vm2115 = vcmp.eq.f32.partialorder %v1761, 0.0
      %v2116 = vand.u32 %v1761, 2147483648
      %v2117 = vsel %vm2115, %v2116, %v2114
      %v2118 = vrsqrt.pop %v1764
      %v2119 = vmul.f32 %v1764, %v2118
      %vm2120 = vcmp.eq.f32.partialorder %v1764, inf
      %v2121 = vsel %vm2120, %v1764, %v2119
      %vm2122 = vcmp.eq.f32.partialorder %v1764, 0.0
      %v2123 = vand.u32 %v1764, 2147483648
      %v2124 = vsel %vm2122, %v2123, %v2121
      %v2125 = vrsqrt.pop %v1767
      %v2126 = vmul.f32 %v1767, %v2125
      %vm2127 = vcmp.eq.f32.partialorder %v1767, inf
      %v2128 = vsel %vm2127, %v1767, %v2126
      %vm2129 = vcmp.eq.f32.partialorder %v1767, 0.0
      %v2130 = vand.u32 %v1767, 2147483648
      %v2131 = vsel %vm2129, %v2130, %v2128
      %v2132 = vrsqrt.pop %v1770
      %v2133 = vmul.f32 %v1770, %v2132
      %vm2134 = vcmp.eq.f32.partialorder %v1770, inf
      %v2135 = vsel %vm2134, %v1770, %v2133
      %vm2136 = vcmp.eq.f32.partialorder %v1770, 0.0
      %v2137 = vand.u32 %v1770, 2147483648
      %v2138 = vsel %vm2136, %v2137, %v2135
      %v2139 = vrsqrt.pop %v1773
      %v2140 = vmul.f32 %v1773, %v2139
      %vm2141 = vcmp.eq.f32.partialorder %v1773, inf
      %v2142 = vsel %vm2141, %v1773, %v2140
      %vm2143 = vcmp.eq.f32.partialorder %v1773, 0.0
      %v2144 = vand.u32 %v1773, 2147483648
      %v2145 = vsel %vm2143, %v2144, %v2142
      %v2146 = vrsqrt.pop %v1776
      %v2147 = vmul.f32 %v1776, %v2146
      %vm2148 = vcmp.eq.f32.partialorder %v1776, inf
      %v2149 = vsel %vm2148, %v1776, %v2147
      %vm2150 = vcmp.eq.f32.partialorder %v1776, 0.0
      %v2151 = vand.u32 %v1776, 2147483648
      %v2152 = vsel %vm2150, %v2151, %v2149
      %v2153 = vrsqrt.pop %v1779
      %v2154 = vmul.f32 %v1779, %v2153
      %vm2155 = vcmp.eq.f32.partialorder %v1779, inf
      %v2156 = vsel %vm2155, %v1779, %v2154
      %vm2157 = vcmp.eq.f32.partialorder %v1779, 0.0
      %v2158 = vand.u32 %v1779, 2147483648
      %v2159 = vsel %vm2157, %v2158, %v2156
      %v2160 = vrsqrt.pop %v1782
      %v2161 = vmul.f32 %v1782, %v2160
      %vm2162 = vcmp.eq.f32.partialorder %v1782, inf
      %v2163 = vsel %vm2162, %v1782, %v2161
      %vm2164 = vcmp.eq.f32.partialorder %v1782, 0.0
      %v2165 = vand.u32 %v1782, 2147483648
      %v2166 = vsel %vm2164, %v2165, %v2163
      %v2167 = vrsqrt.pop %v1785
      %v2168 = vmul.f32 %v1785, %v2167
      %vm2169 = vcmp.eq.f32.partialorder %v1785, inf
      %v2170 = vsel %vm2169, %v1785, %v2168
      %vm2171 = vcmp.eq.f32.partialorder %v1785, 0.0
      %v2172 = vand.u32 %v1785, 2147483648
      %v2173 = vsel %vm2171, %v2172, %v2170
      %v2174 = vrsqrt.pop %v1788
      %v2175 = vmul.f32 %v1788, %v2174
      %vm2176 = vcmp.eq.f32.partialorder %v1788, inf
      %v2177 = vsel %vm2176, %v1788, %v2175
      %vm2178 = vcmp.eq.f32.partialorder %v1788, 0.0
      %v2179 = vand.u32 %v1788, 2147483648
      %v2180 = vsel %vm2178, %v2179, %v2177
      %v2181 = vrsqrt.pop %v1791
      %v2182 = vmul.f32 %v1791, %v2181
      %vm2183 = vcmp.eq.f32.partialorder %v1791, inf
      %v2184 = vsel %vm2183, %v1791, %v2182
      %vm2185 = vcmp.eq.f32.partialorder %v1791, 0.0
      %v2186 = vand.u32 %v1791, 2147483648
      %v2187 = vsel %vm2185, %v2186, %v2184
      %v2188 = vrsqrt.pop %v1794
      %v2189 = vmul.f32 %v1794, %v2188
      %vm2190 = vcmp.eq.f32.partialorder %v1794, inf
      %v2191 = vsel %vm2190, %v1794, %v2189
      %vm2192 = vcmp.eq.f32.partialorder %v1794, 0.0
      %v2193 = vand.u32 %v1794, 2147483648
      %v2194 = vsel %vm2192, %v2193, %v2191
      %v2195 = vadd.f32 %v2089, 1e-08
      %v2196 = vadd.f32 %v2096, 1e-08
      %v2197 = vadd.f32 %v2103, 1e-08
      %v2198 = vadd.f32 %v2110, 1e-08
      %v2199 = vadd.f32 %v2117, 1e-08
      %v2200 = vadd.f32 %v2124, 1e-08
      %v2201 = vadd.f32 %v2131, 1e-08
      %v2202 = vadd.f32 %v2138, 1e-08
      %v2203 = vadd.f32 %v2145, 1e-08
      %v2204 = vadd.f32 %v2152, 1e-08
      %v2205 = vadd.f32 %v2159, 1e-08
      %v2206 = vadd.f32 %v2166, 1e-08
      %v2207 = vadd.f32 %v2173, 1e-08
      %v2208 = vadd.f32 %v2180, 1e-08
      %v2209 = vadd.f32 %v2187, 1e-08
      %v2210 = vadd.f32 %v2194, 1e-08
      %v2211 = vrcp.pop %v2195
      %v2212 = vrcp.pop %v2196
      %v2213 = vrcp.pop %v2197
      %v2214 = vrcp.pop %v2198
      %v2215 = vrcp.pop %v2199
      %v2216 = vrcp.pop %v2200
      %v2217 = vrcp.pop %v2201
      %v2218 = vrcp.pop %v2202
      %v2219 = vrcp.pop %v2203
      %v2220 = vrcp.pop %v2204
      %v2221 = vrcp.pop %v2205
      %v2222 = vrcp.pop %v2206
      %v2223 = vrcp.pop %v2207
      %v2224 = vrcp.pop %v2208
      %v2225 = vrcp.pop %v2209
      %v2226 = vrcp.pop %v2210
      %v2227 = vadd.f32 %v1235, %v1731
      %v2228 = vadd.f32 %v1236, %v1732
      %v2229 = vadd.f32 %v1237, %v1733
      %v2230 = vadd.f32 %v1238, %v1734
      %v2231 = vadd.f32 %v1239, %v1735
      %v2232 = vadd.f32 %v1240, %v1736
      %v2233 = vadd.f32 %v1241, %v1737
      %v2234 = vadd.f32 %v1242, %v1738
      %v2235 = vadd.f32 %v1243, %v1739
      %v2236 = vadd.f32 %v1244, %v1740
      %v2237 = vadd.f32 %v1245, %v1741
      %v2238 = vadd.f32 %v1246, %v1742
      %v2239 = vadd.f32 %v1247, %v1743
      %v2240 = vadd.f32 %v1248, %v1744
      %v2241 = vadd.f32 %v1249, %v1745
      %v2242 = vadd.f32 %v1250, %v1746
      %v2243 = vadd.f32 %v2227, %v2211
      %v2244 = vadd.f32 %v2228, %v2212
      %v2245 = vadd.f32 %v2229, %v2213
      %v2246 = vadd.f32 %v2230, %v2214
      %v2247 = vadd.f32 %v2231, %v2215
      %v2248 = vadd.f32 %v2232, %v2216
      %v2249 = vadd.f32 %v2233, %v2217
      %v2250 = vadd.f32 %v2234, %v2218
      %v2251 = vadd.f32 %v2235, %v2219
      %v2252 = vadd.f32 %v2236, %v2220
      %v2253 = vadd.f32 %v2237, %v2221
      %v2254 = vadd.f32 %v2238, %v2222
      %v2255 = vadd.f32 %v2239, %v2223
      %v2256 = vadd.f32 %v2240, %v2224
      %v2257 = vadd.f32 %v2241, %v2225
      %v2258 = vadd.f32 %v2242, %v2226
      %v2259 = vrcp.pop %v2243
      %v2260 = vrcp.pop %v2244
      %v2261 = vrcp.pop %v2245
      %v2262 = vrcp.pop %v2246
      %v2263 = vrcp.pop %v2247
      %v2264 = vrcp.pop %v2248
      %v2265 = vrcp.pop %v2249
      %v2266 = vrcp.pop %v2250
      %v2267 = vrcp.pop %v2251
      %v2268 = vrcp.pop %v2252
      %v2269 = vrcp.pop %v2253
      %v2270 = vrcp.pop %v2254
      %v2271 = vrcp.pop %v2255
      %v2272 = vrcp.pop %v2256
      %v2273 = vrcp.pop %v2257
      %v2274 = vrcp.pop %v2258
      %v2275 = vmul.f32 %v1235, %v2259
      %v2276 = vmul.f32 %v1236, %v2260
      %v2277 = vmul.f32 %v1237, %v2261
      %v2278 = vmul.f32 %v1238, %v2262
      %v2279 = vmul.f32 %v1239, %v2263
      %v2280 = vmul.f32 %v1240, %v2264
      %v2281 = vmul.f32 %v1241, %v2265
      %v2282 = vmul.f32 %v1242, %v2266
      %v2283 = vmul.f32 %v1243, %v2267
      %v2284 = vmul.f32 %v1244, %v2268
      %v2285 = vmul.f32 %v1245, %v2269
      %v2286 = vmul.f32 %v1246, %v2270
      %v2287 = vmul.f32 %v1247, %v2271
      %v2288 = vmul.f32 %v1248, %v2272
      %v2289 = vmul.f32 %v1249, %v2273
      %v2290 = vmul.f32 %v1250, %v2274
      %v2291 = vsel %vm1075, 1, 0
      %v2292 = vsel %vm1076, 1, 0
      %v2293 = vsel %vm1077, 1, 0
      %v2294 = vsel %vm1078, 1, 0
      %v2295 = vsel %vm1079, 1, 0
      %v2296 = vsel %vm1080, 1, 0
      %v2297 = vsel %vm1081, 1, 0
      %v2298 = vsel %vm1082, 1, 0
      %v2299 = vsel %vm1083, 1, 0
      %v2300 = vsel %vm1084, 1, 0
      %v2301 = vsel %vm1085, 1, 0
      %v2302 = vsel %vm1086, 1, 0
      %v2303 = vsel %vm1087, 1, 0
      %v2304 = vsel %vm1088, 1, 0
      %v2305 = vsel %vm1089, 1, 0
      %v2306 = vsel %vm1090, 1, 0
      %v2307 = vcvt.s32.f32 %v2291
      %v2308 = vcvt.s32.f32 %v2292
      %v2309 = vcvt.s32.f32 %v2293
      %v2310 = vcvt.s32.f32 %v2294
      %v2311 = vcvt.s32.f32 %v2295
      %v2312 = vcvt.s32.f32 %v2296
      %v2313 = vcvt.s32.f32 %v2297
      %v2314 = vcvt.s32.f32 %v2298
      %v2315 = vcvt.s32.f32 %v2299
      %v2316 = vcvt.s32.f32 %v2300
      %v2317 = vcvt.s32.f32 %v2301
      %v2318 = vcvt.s32.f32 %v2302
      %v2319 = vcvt.s32.f32 %v2303
      %v2320 = vcvt.s32.f32 %v2304
      %v2321 = vcvt.s32.f32 %v2305
      %v2322 = vcvt.s32.f32 %v2306
      %v2323 = vmul.f32 %v2275, %v2307
      %v2324 = vmul.f32 %v2276, %v2308
      %v2325 = vmul.f32 %v2277, %v2309
      %v2326 = vmul.f32 %v2278, %v2310
      %v2327 = vmul.f32 %v2279, %v2311
      %v2328 = vmul.f32 %v2280, %v2312
      %v2329 = vmul.f32 %v2281, %v2313
      %v2330 = vmul.f32 %v2282, %v2314
      %v2331 = vmul.f32 %v2283, %v2315
      %v2332 = vmul.f32 %v2284, %v2316
      %v2333 = vmul.f32 %v2285, %v2317
      %v2334 = vmul.f32 %v2286, %v2318
      %v2335 = vmul.f32 %v2287, %v2319
      %v2336 = vmul.f32 %v2288, %v2320
      %v2337 = vmul.f32 %v2289, %v2321
      %v2338 = vmul.f32 %v2290, %v2322
      %v2339 = vadd.f32 %v2323, 0.0
      %v2340 = vadd.f32 %v2324, 0.0
      %v2341 = vadd.f32 %v2325, 0.0
      %v2342 = vadd.f32 %v2326, 0.0
      %v2343 = vadd.f32 %v2327, 0.0
      %v2344 = vadd.f32 %v2328, 0.0
      %v2345 = vadd.f32 %v2329, 0.0
      %v2346 = vadd.f32 %v2330, 0.0
      %v2347 = vadd.f32 %v2331, 0.0
      %v2348 = vadd.f32 %v2332, 0.0
      %v2349 = vadd.f32 %v2333, 0.0
      %v2350 = vadd.f32 %v2334, 0.0
      %v2351 = vadd.f32 %v2335, 0.0
      %v2352 = vadd.f32 %v2336, 0.0
      %v2353 = vadd.f32 %v2337, 0.0
      %v2354 = vadd.f32 %v2338, 0.0
      %v2355 = vmul.f32 %v1731, %v2259
      %v2356 = vmul.f32 %v1732, %v2260
      %v2357 = vmul.f32 %v1733, %v2261
      %v2358 = vmul.f32 %v1734, %v2262
      %v2359 = vmul.f32 %v1735, %v2263
      %v2360 = vmul.f32 %v1736, %v2264
      %v2361 = vmul.f32 %v1737, %v2265
      %v2362 = vmul.f32 %v1738, %v2266
      %v2363 = vmul.f32 %v1739, %v2267
      %v2364 = vmul.f32 %v1740, %v2268
      %v2365 = vmul.f32 %v1741, %v2269
      %v2366 = vmul.f32 %v1742, %v2270
      %v2367 = vmul.f32 %v1743, %v2271
      %v2368 = vmul.f32 %v1744, %v2272
      %v2369 = vmul.f32 %v1745, %v2273
      %v2370 = vmul.f32 %v1746, %v2274
      %v2371 = vsel %vm1571, 1, 0
      %v2372 = vsel %vm1572, 1, 0
      %v2373 = vsel %vm1573, 1, 0
      %v2374 = vsel %vm1574, 1, 0
      %v2375 = vsel %vm1575, 1, 0
      %v2376 = vsel %vm1576, 1, 0
      %v2377 = vsel %vm1577, 1, 0
      %v2378 = vsel %vm1578, 1, 0
      %v2379 = vsel %vm1579, 1, 0
      %v2380 = vsel %vm1580, 1, 0
      %v2381 = vsel %vm1581, 1, 0
      %v2382 = vsel %vm1582, 1, 0
      %v2383 = vsel %vm1583, 1, 0
      %v2384 = vsel %vm1584, 1, 0
      %v2385 = vsel %vm1585, 1, 0
      %v2386 = vsel %vm1586, 1, 0
      %v2387 = vcvt.s32.f32 %v2371
      %v2388 = vcvt.s32.f32 %v2372
      %v2389 = vcvt.s32.f32 %v2373
      %v2390 = vcvt.s32.f32 %v2374
      %v2391 = vcvt.s32.f32 %v2375
      %v2392 = vcvt.s32.f32 %v2376
      %v2393 = vcvt.s32.f32 %v2377
      %v2394 = vcvt.s32.f32 %v2378
      %v2395 = vcvt.s32.f32 %v2379
      %v2396 = vcvt.s32.f32 %v2380
      %v2397 = vcvt.s32.f32 %v2381
      %v2398 = vcvt.s32.f32 %v2382
      %v2399 = vcvt.s32.f32 %v2383
      %v2400 = vcvt.s32.f32 %v2384
      %v2401 = vcvt.s32.f32 %v2385
      %v2402 = vcvt.s32.f32 %v2386
      %v2403 = vmul.f32 %v2355, %v2387
      %v2404 = vmul.f32 %v2356, %v2388
      %v2405 = vmul.f32 %v2357, %v2389
      %v2406 = vmul.f32 %v2358, %v2390
      %v2407 = vmul.f32 %v2359, %v2391
      %v2408 = vmul.f32 %v2360, %v2392
      %v2409 = vmul.f32 %v2361, %v2393
      %v2410 = vmul.f32 %v2362, %v2394
      %v2411 = vmul.f32 %v2363, %v2395
      %v2412 = vmul.f32 %v2364, %v2396
      %v2413 = vmul.f32 %v2365, %v2397
      %v2414 = vmul.f32 %v2366, %v2398
      %v2415 = vmul.f32 %v2367, %v2399
      %v2416 = vmul.f32 %v2368, %v2400
      %v2417 = vmul.f32 %v2369, %v2401
      %v2418 = vmul.f32 %v2370, %v2402
      %v2419 = vadd.f32 %v2339, %v2403
      %v2420 = vadd.f32 %v2340, %v2404
      %v2421 = vadd.f32 %v2341, %v2405
      %v2422 = vadd.f32 %v2342, %v2406
      %v2423 = vadd.f32 %v2343, %v2407
      %v2424 = vadd.f32 %v2344, %v2408
      %v2425 = vadd.f32 %v2345, %v2409
      %v2426 = vadd.f32 %v2346, %v2410
      %v2427 = vadd.f32 %v2347, %v2411
      %v2428 = vadd.f32 %v2348, %v2412
      %v2429 = vadd.f32 %v2349, %v2413
      %v2430 = vadd.f32 %v2350, %v2414
      %v2431 = vadd.f32 %v2351, %v2415
      %v2432 = vadd.f32 %v2352, %v2416
      %v2433 = vadd.f32 %v2353, %v2417
      %v2434 = vadd.f32 %v2354, %v2418
      %v2435 = vmul.f32 %v2211, %v2259
      %v2436 = vmul.f32 %v2212, %v2260
      %v2437 = vmul.f32 %v2213, %v2261
      %v2438 = vmul.f32 %v2214, %v2262
      %v2439 = vmul.f32 %v2215, %v2263
      %v2440 = vmul.f32 %v2216, %v2264
      %v2441 = vmul.f32 %v2217, %v2265
      %v2442 = vmul.f32 %v2218, %v2266
      %v2443 = vmul.f32 %v2219, %v2267
      %v2444 = vmul.f32 %v2220, %v2268
      %v2445 = vmul.f32 %v2221, %v2269
      %v2446 = vmul.f32 %v2222, %v2270
      %v2447 = vmul.f32 %v2223, %v2271
      %v2448 = vmul.f32 %v2224, %v2272
      %v2449 = vmul.f32 %v2225, %v2273
      %v2450 = vmul.f32 %v2226, %v2274
      %v2451 = vsel %vm2067, 1, 0
      %v2452 = vsel %vm2068, 1, 0
      %v2453 = vsel %vm2069, 1, 0
      %v2454 = vsel %vm2070, 1, 0
      %v2455 = vsel %vm2071, 1, 0
      %v2456 = vsel %vm2072, 1, 0
      %v2457 = vsel %vm2073, 1, 0
      %v2458 = vsel %vm2074, 1, 0
      %v2459 = vsel %vm2075, 1, 0
      %v2460 = vsel %vm2076, 1, 0
      %v2461 = vsel %vm2077, 1, 0
      %v2462 = vsel %vm2078, 1, 0
      %v2463 = vsel %vm2079, 1, 0
      %v2464 = vsel %vm2080, 1, 0
      %v2465 = vsel %vm2081, 1, 0
      %v2466 = vsel %vm2082, 1, 0
      %v2467 = vcvt.s32.f32 %v2451
      %v2468 = vcvt.s32.f32 %v2452
      %v2469 = vcvt.s32.f32 %v2453
      %v2470 = vcvt.s32.f32 %v2454
      %v2471 = vcvt.s32.f32 %v2455
      %v2472 = vcvt.s32.f32 %v2456
      %v2473 = vcvt.s32.f32 %v2457
      %v2474 = vcvt.s32.f32 %v2458
      %v2475 = vcvt.s32.f32 %v2459
      %v2476 = vcvt.s32.f32 %v2460
      %v2477 = vcvt.s32.f32 %v2461
      %v2478 = vcvt.s32.f32 %v2462
      %v2479 = vcvt.s32.f32 %v2463
      %v2480 = vcvt.s32.f32 %v2464
      %v2481 = vcvt.s32.f32 %v2465
      %v2482 = vcvt.s32.f32 %v2466
      %v2483 = vmul.f32 %v2435, %v2467
      %v2484 = vmul.f32 %v2436, %v2468
      %v2485 = vmul.f32 %v2437, %v2469
      %v2486 = vmul.f32 %v2438, %v2470
      %v2487 = vmul.f32 %v2439, %v2471
      %v2488 = vmul.f32 %v2440, %v2472
      %v2489 = vmul.f32 %v2441, %v2473
      %v2490 = vmul.f32 %v2442, %v2474
      %v2491 = vmul.f32 %v2443, %v2475
      %v2492 = vmul.f32 %v2444, %v2476
      %v2493 = vmul.f32 %v2445, %v2477
      %v2494 = vmul.f32 %v2446, %v2478
      %v2495 = vmul.f32 %v2447, %v2479
      %v2496 = vmul.f32 %v2448, %v2480
      %v2497 = vmul.f32 %v2449, %v2481
      %v2498 = vmul.f32 %v2450, %v2482
      %v2499 = vadd.f32 %v2419, %v2483
      %v2500 = vadd.f32 %v2420, %v2484
      %v2501 = vadd.f32 %v2421, %v2485
      %v2502 = vadd.f32 %v2422, %v2486
      %v2503 = vadd.f32 %v2423, %v2487
      %v2504 = vadd.f32 %v2424, %v2488
      %v2505 = vadd.f32 %v2425, %v2489
      %v2506 = vadd.f32 %v2426, %v2490
      %v2507 = vadd.f32 %v2427, %v2491
      %v2508 = vadd.f32 %v2428, %v2492
      %v2509 = vadd.f32 %v2429, %v2493
      %v2510 = vadd.f32 %v2430, %v2494
      %v2511 = vadd.f32 %v2431, %v2495
      %v2512 = vadd.f32 %v2432, %v2496
      %v2513 = vadd.f32 %v2433, %v2497
      %v2514 = vadd.f32 %v2434, %v2498
      %v2515 = vld [vmem:[%s4] sm:$0xff]
      %v2516 = vld [vmem:[%s4 + $0x8] sm:$0xff]
      %v2517 = vld [vmem:[%s4 + $0x10] sm:$0xff]
      %v2518 = vld [vmem:[%s4 + $0x18] sm:$0xff]
      %v2519 = vld [vmem:[%s4 + $0x20] sm:$0xff]
      %v2520 = vld [vmem:[%s4 + $0x28] sm:$0xff]
      %v2521 = vld [vmem:[%s4 + $0x30] sm:$0xff]
      %v2522 = vld [vmem:[%s4 + $0x38] sm:$0xff]
      %v2524 = vsel %vm754, %v2499, 0
      %v2527 = vsel %vm754, %v2500, 0
      %v2530 = vsel %vm754, %v2501, 0
      %v2533 = vsel %vm754, %v2502, 0
      %v2536 = vsel %vm754, %v2503, 0
      %v2539 = vsel %vm754, %v2504, 0
      %v2542 = vsel %vm754, %v2505, 0
      %v2545 = vsel %vm754, %v2506, 0
      %v2548 = vsel %vm754, %v2507, 0
      %v2551 = vsel %vm754, %v2508, 0
      %v2554 = vsel %vm754, %v2509, 0
      %v2557 = vsel %vm754, %v2510, 0
      %v2560 = vsel %vm754, %v2511, 0
      %v2563 = vsel %vm754, %v2512, 0
      %v2566 = vsel %vm754, %v2513, 0
      %v2569 = vsel %vm754, %v2514, 0
      %2571 = vmatprep.subr.mxu0 0.0
      %2572 = vmatpush1.msra.mxu0 %v2515
      %2573 = vmatprep.subr.mxu0 0.0
      %2574 = vmatpush1.msra.mxu0 %v2516
      %2575 = vmatprep.subr.mxu0 0.0
      %2576 = vmatpush1.msra.mxu0 %v2517
      %2577 = vmatprep.subr.mxu0 0.0
      %2578 = vmatpush1.msra.mxu0 %v2518
      %2579 = vmatprep.subr.mxu0 0.0
      %2580 = vmatpush1.msra.mxu0 %v2519
      %2581 = vmatprep.subr.mxu0 0.0
      %2582 = vmatpush1.msra.mxu0 %v2520
      %2583 = vmatprep.subr.mxu0 0.0
      %2584 = vmatpush1.msra.mxu0 %v2521
      %2585 = vmatprep.subr.mxu0 0.0
      %2586 = vmatpush1.msra.mxu0 %v2522
      %2587 = vmatprep.subr.mxu0 0.0
      %2588 = vmatpush1.msra.mxu0 0.0
      %2589 = vmatprep.subr.mxu0 0.0
      %2590 = vmatpush1.msra.mxu0 0.0
      %2591 = vmatprep.subr.mxu0 0.0
      %2592 = vmatpush1.msra.mxu0 0.0
      %2593 = vmatprep.subr.mxu0 0.0
      %2594 = vmatpush1.msra.mxu0 0.0
      %2595 = vmatprep.subr.mxu0 0.0
      %2596 = vmatpush1.msra.mxu0 0.0
      %2597 = vmatprep.subr.mxu0 0.0
      %2598 = vmatpush1.msra.mxu0 0.0
      %2599 = vmatprep.subr.mxu0 0.0
      %2600 = vmatpush1.msra.mxu0 0.0
      %2601 = vmatprep.subr.mxu0 0.0
      %2602 = vmatpush1.msra.mxu0 0.0
      %2603 = vmatprep.subr.mxu0 0.0
      %2604 = vmatpush1.msra.mxu0 0.0
      %2605 = vmatprep.subr.mxu0 0.0
      %2606 = vmatpush1.msra.mxu0 0.0
      %2607 = vmatprep.subr.mxu0 0.0
      %2608 = vmatpush1.msra.mxu0 0.0
      %2609 = vmatprep.subr.mxu0 0.0
      %2610 = vmatpush1.msra.mxu0 0.0
      %2611 = vmatprep.subr.mxu0 0.0
      %2612 = vmatpush1.msra.mxu0 0.0
      %2613 = vmatprep.subr.mxu0 0.0
      %2614 = vmatpush1.msra.mxu0 0.0
      %2615 = vmatprep.subr.mxu0 0.0
      %2616 = vmatpush1.msra.mxu0 0.0
      %2617 = vmatprep.subr.mxu0 0.0
      %2618 = vmatpush1.msra.mxu0 0.0
      %2619 = vmatprep.subr.mxu0 0.0
      %2620 = vmatpush1.msra.mxu0 0.0
      %2621 = vmatprep.subr.mxu0 0.0
      %2622 = vmatpush1.msra.mxu0 0.0
      %2623 = vmatprep.subr.mxu0 0.0
      %2624 = vmatpush1.msra.mxu0 0.0
      %2625 = vmatprep.subr.mxu0 0.0
      %2626 = vmatpush1.msra.mxu0 0.0
      %2627 = vmatprep.subr.mxu0 0.0
      %2628 = vmatpush1.msra.mxu0 0.0
      %2629 = vmatprep.subr.mxu0 0.0
      %2630 = vmatpush1.msra.mxu0 0.0
      %2631 = vmatprep.subr.mxu0 0.0
      %2632 = vmatpush1.msra.mxu0 0.0
      %2633 = vmatprep.subr.mxu0 0.0
      %2634 = vmatpush1.msra.mxu0 0.0
      %2635 = vmatprep.mubr.f32.mxu0 0.0
      %2636 = vmatmul.mubr.f32.gmra.mrb[0].mxu0 %v2524
      %v2637 = vpop.f32.mrb[0].mxu0
      %v2638 = vadd.f32 0.0, %v2637
      %v2639 = vpop.f32.mrb[0].mxu0
      %2640 = vmatprep.mubr.f32.mxu0 0.0
      %2641 = vmatmul.mubr.f32.gmra.mrb[0].mxu0 %v2527
      %v2642 = vpop.f32.mrb[0].mxu0
      %v2643 = vadd.f32 0.0, %v2642
      %v2644 = vpop.f32.mrb[0].mxu0
      %2645 = vmatprep.mubr.f32.mxu0 0.0
      %2646 = vmatmul.mubr.f32.gmra.mrb[0].mxu0 %v2530
      %v2647 = vpop.f32.mrb[0].mxu0
      %v2648 = vadd.f32 0.0, %v2647
      %v2649 = vpop.f32.mrb[0].mxu0
      %2650 = vmatprep.mubr.f32.mxu0 0.0
      %2651 = vmatmul.mubr.f32.gmra.mrb[0].mxu0 %v2533
      %v2652 = vpop.f32.mrb[0].mxu0
      %v2653 = vadd.f32 0.0, %v2652
      %v2654 = vpop.f32.mrb[0].mxu0
      %2655 = vmatprep.mubr.f32.mxu0 0.0
      %2656 = vmatmul.mubr.f32.gmra.mrb[0].mxu0 %v2536
      %v2657 = vpop.f32.mrb[0].mxu0
      %v2658 = vadd.f32 0.0, %v2657
      %v2659 = vpop.f32.mrb[0].mxu0
      %2660 = vmatprep.mubr.f32.mxu0 0.0
      %2661 = vmatmul.mubr.f32.gmra.mrb[0].mxu0 %v2539
      %v2662 = vpop.f32.mrb[0].mxu0
      %v2663 = vadd.f32 0.0, %v2662
      %v2664 = vpop.f32.mrb[0].mxu0
      %2665 = vmatprep.mubr.f32.mxu0 0.0
      %2666 = vmatmul.mubr.f32.gmra.mrb[0].mxu0 %v2542
      %v2667 = vpop.f32.mrb[0].mxu0
      %v2668 = vadd.f32 0.0, %v2667
      %v2669 = vpop.f32.mrb[0].mxu0
      %2670 = vmatprep.mubr.f32.mxu0 0.0
      %2671 = vmatmul.mubr.f32.gmra.mrb[0].mxu0 %v2545
      %v2672 = vpop.f32.mrb[0].mxu0
      %v2673 = vadd.f32 0.0, %v2672
      %v2674 = vpop.f32.mrb[0].mxu0
      %2675 = vmatprep.mubr.f32.mxu0 0.0
      %2676 = vmatmul.mubr.f32.gmra.mrb[0].mxu0 %v2548
      %v2677 = vpop.f32.mrb[0].mxu0
      %v2678 = vadd.f32 0.0, %v2677
      %v2679 = vpop.f32.mrb[0].mxu0
      %2680 = vmatprep.mubr.f32.mxu0 0.0
      %2681 = vmatmul.mubr.f32.gmra.mrb[0].mxu0 %v2551
      %v2682 = vpop.f32.mrb[0].mxu0
      %v2683 = vadd.f32 0.0, %v2682
      %v2684 = vpop.f32.mrb[0].mxu0
      %2685 = vmatprep.mubr.f32.mxu0 0.0
      %2686 = vmatmul.mubr.f32.gmra.mrb[0].mxu0 %v2554
      %v2687 = vpop.f32.mrb[0].mxu0
      %v2688 = vadd.f32 0.0, %v2687
      %v2689 = vpop.f32.mrb[0].mxu0
      %2690 = vmatprep.mubr.f32.mxu0 0.0
      %2691 = vmatmul.mubr.f32.gmra.mrb[0].mxu0 %v2557
      %v2692 = vpop.f32.mrb[0].mxu0
      %v2693 = vadd.f32 0.0, %v2692
      %v2694 = vpop.f32.mrb[0].mxu0
      %2695 = vmatprep.mubr.f32.mxu0 0.0
      %2696 = vmatmul.mubr.f32.gmra.mrb[0].mxu0 %v2560
      %v2697 = vpop.f32.mrb[0].mxu0
      %v2698 = vadd.f32 0.0, %v2697
      %v2699 = vpop.f32.mrb[0].mxu0
      %2700 = vmatprep.mubr.f32.mxu0 0.0
      %2701 = vmatmul.mubr.f32.gmra.mrb[0].mxu0 %v2563
      %v2702 = vpop.f32.mrb[0].mxu0
      %v2703 = vadd.f32 0.0, %v2702
      %v2704 = vpop.f32.mrb[0].mxu0
      %2705 = vmatprep.mubr.f32.mxu0 0.0
      %2706 = vmatmul.mubr.f32.gmra.mrb[0].mxu0 %v2566
      %v2707 = vpop.f32.mrb[0].mxu0
      %v2708 = vadd.f32 0.0, %v2707
      %v2709 = vpop.f32.mrb[0].mxu0
      %2710 = vmatprep.mubr.f32.mxu0 0.0
      %2711 = vmatmul.mubr.f32.gmra.mrb[0].mxu0 %v2569
      %v2712 = vpop.f32.mrb[0].mxu0
      %v2713 = vadd.f32 0.0, %v2712
      %v2714 = vpop.f32.mrb[0].mxu0
      %2715 = vdwg.mxu0
      %v2716 = vld [vmem:[%s291] sm:$0xff]
      %v2717 = vld [vmem:[%s291 + $0x8] sm:$0xff]
      %v2718 = vld [vmem:[%s291 + $0x10] sm:$0xff]
      %v2719 = vld [vmem:[%s291 + $0x18] sm:$0xff]
      %v2720 = vld [vmem:[%s291 + $0x20] sm:$0xff]
      %v2721 = vld [vmem:[%s291 + $0x28] sm:$0xff]
      %v2722 = vld [vmem:[%s291 + $0x30] sm:$0xff]
      %v2723 = vld [vmem:[%s291 + $0x38] sm:$0xff]
      %v2724 = vld [vmem:[%s291 + $0x40] sm:$0xff]
      %v2725 = vld [vmem:[%s291 + $0x48] sm:$0xff]
      %v2726 = vld [vmem:[%s291 + $0x50] sm:$0xff]
      %v2727 = vld [vmem:[%s291 + $0x58] sm:$0xff]
      %v2728 = vld [vmem:[%s291 + $0x60] sm:$0xff]
      %v2729 = vld [vmem:[%s291 + $0x68] sm:$0xff]
      %v2730 = vld [vmem:[%s291 + $0x70] sm:$0xff]
      %v2731 = vld [vmem:[%s291 + $0x78] sm:$0xff]
      %2748 = vrot.lane.b32.xlu0 %v2716, 8
      %v2749 = vpop.permute.xlu0 %2748
      %2750 = vrot.lane.b32.xlu0 %v2717, 8
      %v2751 = vpop.permute.xlu0 %2750
      %2752 = vrot.lane.b32.xlu0 %v2718, 8
      %v2753 = vpop.permute.xlu0 %2752
      %2754 = vrot.lane.b32.xlu0 %v2719, 8
      %v2755 = vpop.permute.xlu0 %2754
      %2756 = vrot.lane.b32.xlu0 %v2720, 8
      %v2757 = vpop.permute.xlu0 %2756
      %2758 = vrot.lane.b32.xlu0 %v2721, 8
      %v2759 = vpop.permute.xlu0 %2758
      %2760 = vrot.lane.b32.xlu0 %v2722, 8
      %v2761 = vpop.permute.xlu0 %2760
      %2762 = vrot.lane.b32.xlu0 %v2723, 8
      %v2763 = vpop.permute.xlu0 %2762
      %2764 = vrot.lane.b32.xlu0 %v2724, 8
      %v2765 = vpop.permute.xlu0 %2764
      %2766 = vrot.lane.b32.xlu0 %v2725, 8
      %v2767 = vpop.permute.xlu0 %2766
      %2768 = vrot.lane.b32.xlu0 %v2726, 8
      %v2769 = vpop.permute.xlu0 %2768
      %2770 = vrot.lane.b32.xlu0 %v2727, 8
      %v2771 = vpop.permute.xlu0 %2770
      %2772 = vrot.lane.b32.xlu0 %v2728, 8
      %v2773 = vpop.permute.xlu0 %2772
      %2774 = vrot.lane.b32.xlu0 %v2729, 8
      %v2775 = vpop.permute.xlu0 %2774
      %2776 = vrot.lane.b32.xlu0 %v2730, 8
      %v2777 = vpop.permute.xlu0 %2776
      %2778 = vrot.lane.b32.xlu0 %v2731, 8
      %v2779 = vpop.permute.xlu0 %2778
      %vm2796 = vcmask 64512
      %v2797 = vsel %vm2796, %v2638, %v2749
      %v2798 = vsel %vm2796, %v2643, %v2751
      %v2799 = vsel %vm2796, %v2648, %v2753
      %v2800 = vsel %vm2796, %v2653, %v2755
      %v2801 = vsel %vm2796, %v2658, %v2757
      %v2802 = vsel %vm2796, %v2663, %v2759
      %v2803 = vsel %vm2796, %v2668, %v2761
      %v2804 = vsel %vm2796, %v2673, %v2763
      %v2805 = vsel %vm2796, %v2678, %v2765
      %v2806 = vsel %vm2796, %v2683, %v2767
      %v2807 = vsel %vm2796, %v2688, %v2769
      %v2808 = vsel %vm2796, %v2693, %v2771
      %v2809 = vsel %vm2796, %v2698, %v2773
      %v2810 = vsel %vm2796, %v2703, %v2775
      %v2811 = vsel %vm2796, %v2708, %v2777
      %v2812 = vsel %vm2796, %v2713, %v2779
      %vm2813 = vcmask 130048
      %2814 = vst.msk [vmem:[%s297] sm:$0xff] %vm2813, %v2797
      %2815 = vst.msk [vmem:[%s297 + $0x8] sm:$0xff] %vm2813, %v2798
      %2816 = vst.msk [vmem:[%s297 + $0x10] sm:$0xff] %vm2813, %v2799
      %2817 = vst.msk [vmem:[%s297 + $0x18] sm:$0xff] %vm2813, %v2800
      %2818 = vst.msk [vmem:[%s297 + $0x20] sm:$0xff] %vm2813, %v2801
      %2819 = vst.msk [vmem:[%s297 + $0x28] sm:$0xff] %vm2813, %v2802
      %2820 = vst.msk [vmem:[%s297 + $0x30] sm:$0xff] %vm2813, %v2803
      %2821 = vst.msk [vmem:[%s297 + $0x38] sm:$0xff] %vm2813, %v2804
      %2822 = vst.msk [vmem:[%s297 + $0x40] sm:$0xff] %vm2813, %v2805
      %2823 = vst.msk [vmem:[%s297 + $0x48] sm:$0xff] %vm2813, %v2806
      %2824 = vst.msk [vmem:[%s297 + $0x50] sm:$0xff] %vm2813, %v2807
      %2825 = vst.msk [vmem:[%s297 + $0x58] sm:$0xff] %vm2813, %v2808
      %2826 = vst.msk [vmem:[%s297 + $0x60] sm:$0xff] %vm2813, %v2809
      %2827 = vst.msk [vmem:[%s297 + $0x68] sm:$0xff] %vm2813, %v2810
      %2828 = vst.msk [vmem:[%s297 + $0x70] sm:$0xff] %vm2813, %v2811
      %2829 = vst.msk [vmem:[%s297 + $0x78] sm:$0xff] %vm2813, %v2812
      %s2830 = smul.u32 16, %s17
      %p2831 = scmp.lt.s32.totalorder %s2830, 31
      %s2832 = scalar_select %p2831, %s2830, 31
      %s2833 = smul.addr %s2832, 8
      %s2834 = scalar_lea.vmem %s6, %s2833
      // Predicated region
      $region45: #{tpu_custom_call.1} parent=43 // pred_check
        %p2835 = pneg %p176
      $region46: #{tpu_custom_call.1} parent=43 // pred_check_branch
        %2837 = sbr.rel (%p2835) target = $region48
      $region47: #{tpu_custom_call.1} parent=43 // pred_region
        %s2838 = smul.u32 16, %s17
      $region48: #{tpu_custom_call.1} parent=43 // pred_fallthru
        _
    $region44: #{tpu_custom_call.1} parent=5 // pred_fallthru
      _
    %p2839 = scmp.le.s32.totalorder 2, %s12
    // Predicated region
    $region49: #{tpu_custom_call.1} parent=5 // pred_check
      %p2840 = pneg %p2839
    $region50: #{tpu_custom_call.1} parent=5 // pred_check_branch
      %2842 = sbr.rel (%p2840) target = $region52
    $region51: #{tpu_custom_call.1} parent=5 // pred_region
      %s2843 = ssub.s32 %s12, 2
      // Predicated region
      $region53: #{tpu_custom_call.1} parent=51 // pred_check
        %p2844 = pneg %p182
      $region54: #{tpu_custom_call.1} parent=51 // pred_check_branch
        %2846 = sbr.rel (%p2844) target = $region56
      $region55: #{tpu_custom_call.1} parent=51 // pred_region
        %s2847 = smul.u32 16, %s18
        %p2848 = scmp.lt.s32.totalorder %s2847, 31
        %s2849 = scalar_select %p2848, %s2847, 31
        %s2850 = smul.addr %s2849, 8
        %s2851 = scalar_lea.vmem %s6, %s2850
      $region56: #{tpu_custom_call.1} parent=51 // pred_fallthru
        _
    $region52: #{tpu_custom_call.1} parent=5 // pred_fallthru
      _
  $region6: #{tpu_custom_call.1} parent=0 // loop_footer
    %s16 = sadd.s32 1, %s12
  $region7: #{tpu_custom_call.1} parent=0 // loop_footer_branch
    %11 = sbr.rel target = $region3
  $region8: #{tpu_custom_call.1} parent=0 // loop_exit
    _

</llo_original>
